<compile_context>
chip_gen: v7x
topology: tpu7x:2x2x1
jax: 0.10.0
libtpu: 0.0.40
codegen_flags: <defaults>
</compile_context>

<pallas_src>
import functools

import jax
import jax.numpy as jnp
from jax.experimental import pallas as pl
from jax.experimental.pallas import tpu as pltpu


def _mha_kernel(*refs, hd, head_block, weights_resident, approx_recip, with_attn):
    """One (batch, q-tile, head-block) grid step.

    q_ref            : (Sq, H)        query rows for this q-tile (compute dtype)
    k_ref, v_ref     : (Skv, H)       full key/value rows for this batch element
    wq/wk/wv_ref     : (H, hb*hd)     packed per-head-block projection weights
                       (or (n_hb, H, hb*hd) when VMEM-resident)
    bq/bk/bv_ref     : (1, hb*hd)     packed biases (fp32)
    wfc_ref          : (hb*hd, H)     packed slice of the output projection
    bfc_ref          : (1, H)         output bias (fp32, added on the last block)
    out_ref          : (Sq, H)        resident across the head-block axis
    attn_ref         : (hb, Sq, Skv)  attention weights (optional output)
    acc_ref          : (Sq, H)        fp32 accumulator scratch
    k_cache, v_cache : (n_hb, Skv, hb*hd) projected K/V cache (compute dtype)
    """
    if with_attn:
        (q_ref, k_ref, v_ref,
         wq_ref, bq_ref, wk_ref, bk_ref, wv_ref, bv_ref,
         wfc_ref, bfc_ref,
         out_ref, attn_ref,
         acc_ref, k_cache, v_cache) = refs
    else:
        (q_ref, k_ref, v_ref,
         wq_ref, bq_ref, wk_ref, bk_ref, wv_ref, bv_ref,
         wfc_ref, bfc_ref,
         out_ref,
         acc_ref, k_cache, v_cache) = refs
        attn_ref = None

    qt = pl.program_id(1)            # q-tile index
    hblk = pl.program_id(2)          # head-block index (reduction axis)
    n_hblk = pl.num_programs(2)
    cdt = k_cache.dtype              # compute dtype (bf16 fast path / fp32 parity)

    def w(ref):
        # VMEM-resident weights: whole array loaded once, indexed by head-block.
        return ref[hblk] if weights_resident else ref[...]

    wq = w(wq_ref)
    bq = w(bq_ref)
    wfc = w(wfc_ref)

    # Q projection for this tile (1/sqrt(hd) already folded into wq/bq).
    qh = (jnp.dot(q_ref[...], wq, preferred_element_type=jnp.float32)
          + bq.astype(jnp.float32)).astype(cdt)                    # (Sq, hb*hd)

    # K/V projections: computed once per (batch, head-block) on the first
    # q-tile and cached in VMEM across the q-tile sweep (qt axis = "arbitrary").
    @pl.when(qt == 0)
    def _():
        wk = w(wk_ref)
        bk = w(bk_ref)
        wv = w(wv_ref)
        bv = w(bv_ref)
        kh_new = (jnp.dot(k_ref[...], wk, preferred_element_type=jnp.float32)
                  + bk.astype(jnp.float32))
        vh_new = (jnp.dot(v_ref[...], wv, preferred_element_type=jnp.float32)
                  + bv.astype(jnp.float32))
        k_cache[hblk] = kh_new.astype(cdt)
        v_cache[hblk] = vh_new.astype(cdt)

    kh = k_cache[hblk]                                             # (Skv, hb*hd)
    vh = v_cache[hblk]

    # Per-head attention inside the packed block (static, unrolled loop).
    ctx_parts = []
    for i in range(head_block):
        lo = i * hd
        q_h = qh[:, lo:lo + hd]                                    # (Sq, hd)
        k_h = kh[:, lo:lo + hd]                                    # (Skv, hd)
        v_h = vh[:, lo:lo + hd]                                    # (Skv, hd)

        # energy = q_h @ k_h^T via dot_general contracting last dims
        # (no XLU transpose of K materialized); fp32 accumulation.
        energy = jax.lax.dot_general(
            q_h, k_h, dimension_numbers=(((1,), (1,)), ((), ())),
            preferred_element_type=jnp.float32)                    # (Sq, Skv)

        # Numerically stable softmax in fp32; reciprocal-multiply (EUP when
        # approx_recip on the bf16 path).
        m = jnp.max(energy, axis=-1, keepdims=True)
        e = jnp.exp(energy - m)
        denom = jnp.sum(e, axis=-1, keepdims=True)
        attn = e * pl.reciprocal(denom, approx=approx_recip)

        if attn_ref is not None:
            attn_ref[i] = attn.astype(attn_ref.dtype)

        ctx_parts.append(jnp.dot(attn.astype(cdt), v_h,
                                 preferred_element_type=jnp.float32))  # (Sq, hd)

    ctx = jnp.concatenate(ctx_parts, axis=-1).astype(cdt)          # (Sq, hb*hd)

    # Accumulate the output projection across head blocks (axis 2 = reduction).
    @pl.when(hblk == 0)
    def _():
        acc_ref[...] = jnp.zeros_like(acc_ref)

    acc_ref[...] += jnp.dot(ctx, wfc, preferred_element_type=jnp.float32)

    @pl.when(hblk == n_hblk - 1)
    def _():
        out_ref[...] = (acc_ref[...] + bfc_ref[...]).astype(out_ref.dtype)


def _vmem_limit_bytes():
    """3/4 of physical per-core VMEM (96 MiB on v5e/v6e, 48 MiB on v7x);
    conservative 48 MiB fallback if the query is unavailable."""
    try:
        info = pltpu.get_tpu_info()
        cap = getattr(info, "vmem_capacity_bytes", None)
        if cap is None:
            cap = getattr(info, "vmem_bytes", None)
        if cap:
            return int(cap) * 3 // 4
    except Exception:
        pass
    return 48 * 1024 * 1024


def multi_head_attention(q, k, v, params, n_heads, *, q_block=None,
                         compute_dtype=jnp.bfloat16, attn_dtype=None,
                         return_attention=True):
    """params: PyTorch-style Linear weights W* of shape (H, H) [out, in] and
    biases b* of shape (H,).  Returns (output, attention) like the nn.Module
    (attention is None when return_attention=False)."""
    B, Sq, H = q.shape
    Bk, Skv, Hk = k.shape
    assert v.shape == k.shape and Hk == H and Bk == B
    assert H % n_heads == 0
    hd = H // n_heads
    out_dtype = q.dtype
    if attn_dtype is None:
        attn_dtype = compute_dtype
    approx_recip = jnp.dtype(compute_dtype) == jnp.dtype(jnp.bfloat16)

    # Head packing: make the projection matmul N-dim >= min(256, H) so the
    # 256-wide MXU on v6e/v7x is filled (already saturated on v5e's 128 MXU).
    target = max(1, 256 // hd)
    head_block = 1
    for d in range(1, n_heads + 1):
        if n_heads % d == 0 and d <= target:
            head_block = d
    n_hb = n_heads // head_block
    hb_dim = head_block * hd

    # q-tile size: whole sequence when small, 256 otherwise (128 for very long
    # KV to keep the (q_block, Skv) softmax temporaries within v7x's VMEM).
    if q_block is None:
        q_block = Sq if Sq <= 256 else (128 if Skv >= 4096 else 256)
    assert Sq % q_block == 0
    n_q = Sq // q_block

    inv_scale = 1.0 / float(hd) ** 0.5
    f32 = jnp.float32
    Wq = jnp.asarray(params["Wq"], f32)
    Wk = jnp.asarray(params["Wk"], f32)
    Wv = jnp.asarray(params["Wv"], f32)
    Wfc = jnp.asarray(params["Wfc"], f32)
    bq = jnp.asarray(params["bq"], f32)
    bk = jnp.asarray(params["bk"], f32)
    bv = jnp.asarray(params["bv"], f32)
    bfc = jnp.asarray(params["bfc"], f32)

    # Host-side, one-time layout work: per-head-block weight slabs in the
    # x @ W form, compute dtype (bf16 on the fast path).  1/sqrt(hd) folded
    # into the Q projection so the kernel does no per-step scaling.
    wq_hb = ((Wq * inv_scale).reshape(n_hb, hb_dim, H)
             .transpose(0, 2, 1).astype(compute_dtype))            # (n_hb, H, hb*hd)
    wk_hb = Wk.reshape(n_hb, hb_dim, H).transpose(0, 2, 1).astype(compute_dtype)
    wv_hb = Wv.reshape(n_hb, hb_dim, H).transpose(0, 2, 1).astype(compute_dtype)
    bq_hb = (bq * inv_scale).reshape(n_hb, 1, hb_dim)              # fp32 biases
    bk_hb = bk.reshape(n_hb, 1, hb_dim)
    bv_hb = bv.reshape(n_hb, 1, hb_dim)
    wfc_hb = jnp.transpose(Wfc).reshape(n_hb, hb_dim, H).astype(compute_dtype)
    bfc_2d = bfc.reshape(1, H)

    # Cast activations for the MXU (halves the K/V DMA bytes on the bf16 path).
    qc = q.astype(compute_dtype)
    kc = k.astype(compute_dtype)
    vc = v.astype(compute_dtype)

    # Weights VMEM-resident (DMA'd once, constant block index) when they fit.
    weight_bytes = 4 * H * H * jnp.dtype(compute_dtype).itemsize
    weights_resident = weight_bytes <= 16 * 1024 * 1024

    if weights_resident:
        wq_spec = pl.BlockSpec((n_hb, H, hb_dim), lambda b, qt, h: (0, 0, 0))
        wk_spec = pl.BlockSpec((n_hb, H, hb_dim), lambda b, qt, h: (0, 0, 0))
        wv_spec = pl.BlockSpec((n_hb, H, hb_dim), lambda b, qt, h: (0, 0, 0))
        wfc_spec = pl.BlockSpec((n_hb, hb_dim, H), lambda b, qt, h: (0, 0, 0))
        bq_spec = pl.BlockSpec((n_hb, 1, hb_dim), lambda b, qt, h: (0, 0, 0))
        bk_spec = pl.BlockSpec((n_hb, 1, hb_dim), lambda b, qt, h: (0, 0, 0))
        bv_spec = pl.BlockSpec((n_hb, 1, hb_dim), lambda b, qt, h: (0, 0, 0))
    else:
        wq_spec = pl.BlockSpec((None, H, hb_dim), lambda b, qt, h: (h, 0, 0))
        wk_spec = pl.BlockSpec((None, H, hb_dim), lambda b, qt, h: (h, 0, 0))
        wv_spec = pl.BlockSpec((None, H, hb_dim), lambda b, qt, h: (h, 0, 0))
        wfc_spec = pl.BlockSpec((None, hb_dim, H), lambda b, qt, h: (h, 0, 0))
        bq_spec = pl.BlockSpec((None, 1, hb_dim), lambda b, qt, h: (h, 0, 0))
        bk_spec = pl.BlockSpec((None, 1, hb_dim), lambda b, qt, h: (h, 0, 0))
        bv_spec = pl.BlockSpec((None, 1, hb_dim), lambda b, qt, h: (h, 0, 0))

    q_spec = pl.BlockSpec((None, q_block, H), lambda b, qt, h: (b, qt, 0))
    kv_spec = pl.BlockSpec((None, Skv, H), lambda b, qt, h: (b, 0, 0))
    bfc_spec = pl.BlockSpec((1, H), lambda b, qt, h: (0, 0))

    out_shapes = [jax.ShapeDtypeStruct((B, Sq, H), out_dtype)]
    out_specs = [pl.BlockSpec((None, q_block, H), lambda b, qt, h: (b, qt, 0))]
    if return_attention:
        out_shapes.append(jax.ShapeDtypeStruct((B, n_heads, Sq, Skv), attn_dtype))
        out_specs.append(pl.BlockSpec((None, head_block, q_block, Skv),
                                      lambda b, qt, h: (b, h, qt, 0)))

    kernel = functools.partial(
        _mha_kernel, hd=hd, head_block=head_block,
        weights_resident=weights_resident, approx_recip=approx_recip,
        with_attn=return_attention)

    results = pl.pallas_call(
        kernel,
        out_shape=tuple(out_shapes),
        grid=(B, n_q, n_hb),
        in_specs=[q_spec, kv_spec, kv_spec,
                  wq_spec, bq_spec, wk_spec, bk_spec, wv_spec, bv_spec,
                  wfc_spec, bfc_spec],
        out_specs=tuple(out_specs),
        scratch_shapes=[
            pltpu.VMEM((q_block, H), jnp.float32),                 # fp32 out accum
            pltpu.VMEM((n_hb, Skv, hb_dim), compute_dtype),        # projected K cache
            pltpu.VMEM((n_hb, Skv, hb_dim), compute_dtype),        # projected V cache
        ],
        compiler_params=pltpu.CompilerParams(
            # batch is megacore-parallel; the q-tile axis carries the K/V
            # projection cache (data dep) and the head-block axis is the
            # output-accumulation axis -> both "arbitrary".
            dimension_semantics=("parallel", "arbitrary", "arbitrary"),
            vmem_limit_bytes=_vmem_limit_bytes(),
        ),
    )(qc, kc, vc, wq_hb, bq_hb, wk_hb, bk_hb, wv_hb, bv_hb, wfc_hb, bfc_2d)

    if return_attention:
        out, attn = results
        return out, attn
    out = results[0] if isinstance(results, (tuple, list)) else results
    return out, None


def _reference(q, k, v, params, n_heads):
    """Pure-JAX replica of the PyTorch forward, for validation."""
    B, S, H = q.shape
    hd = H // n_heads
    lin = lambda x, W, b: x @ W.T + b
    qp = lin(q, params["Wq"], params["bq"]).reshape(B, -1, n_heads, hd).transpose(0, 2, 1, 3)
    kp = lin(k, params["Wk"], params["bk"]).reshape(B, -1, n_heads, hd).transpose(0, 2, 1, 3)
    vp = lin(v, params["Wv"], params["bv"]).reshape(B, -1, n_heads, hd).transpose(0, 2, 1, 3)
    energy = jnp.einsum("bhqd,bhkd->bhqk", qp, kp) / jnp.sqrt(jnp.float32(hd))
    attn = jax.nn.softmax(energy, axis=-1)
    ctx = jnp.einsum("bhqk,bhkd->bhqd", attn, vp).transpose(0, 2, 1, 3).reshape(B, -1, H)
    out = lin(ctx, params["Wfc"], params["bfc"])
    return out, attn


def _make_params(key, H):
    keys = jax.random.split(key, 8)
    s = 0.35 / float(H) ** 0.5
    return {
        "Wq": s * jax.random.normal(keys[0], (H, H), jnp.float32),
        "bq": s * jax.random.normal(keys[1], (H,), jnp.float32),
        "Wk": s * jax.random.normal(keys[2], (H, H), jnp.float32),
        "bk": s * jax.random.normal(keys[3], (H,), jnp.float32),
        "Wv": s * jax.random.normal(keys[4], (H, H), jnp.float32),
        "bv": s * jax.random.normal(keys[5], (H,), jnp.float32),
        "Wfc": s * jax.random.normal(keys[6], (H, H), jnp.float32),
        "bfc": s * jax.random.normal(keys[7], (H,), jnp.float32),
    }


def _check_case(key, *, B, S, H, n_heads, q_block, compute_dtype, atol, rtol,
                check_no_attn=False):
    kq, kk, kv, kp = jax.random.split(key, 4)
    q = jax.random.normal(kq, (B, S, H), jnp.float32)
    k = jax.random.normal(kk, (B, S, H), jnp.float32)
    v = jax.random.normal(kv, (B, S, H), jnp.float32)
    params = _make_params(kp, H)

    out, attn = multi_head_attention(q, k, v, params, n_heads, q_block=q_block,
                                     compute_dtype=compute_dtype)
    jax.block_until_ready(out)
    jax.block_until_ready(attn)

    out_ref, attn_ref = _reference(q, k, v, params, n_heads)
    assert jnp.allclose(out, out_ref, atol=atol, rtol=rtol), (
        f"output mismatch ({compute_dtype}, B={B}, S={S}, H={H})")
    assert jnp.allclose(attn.astype(jnp.float32), attn_ref, atol=atol, rtol=rtol), (
        f"attention mismatch ({compute_dtype}, B={B}, S={S}, H={H})")

    if check_no_attn:
        out2, none_attn = multi_head_attention(
            q, k, v, params, n_heads, q_block=q_block,
            compute_dtype=compute_dtype, return_attention=False)
        jax.block_until_ready(out2)
        assert none_attn is None
        assert jnp.allclose(out2, out, atol=1e-5, rtol=1e-5), "no-attn output mismatch"


if __name__ == "__main__":
    root = jax.random.PRNGKey(0)
    key1, key2 = jax.random.split(root)

    # Case 1: small, module-like shapes (B=2, S=8, H=32, 4 heads).
    #   fp32 exact-parity path (tight tolerance) and default bf16 fast path.
    _check_case(key1, B=2, S=8, H=32, n_heads=4, q_block=None,
                compute_dtype=jnp.float32, atol=1e-4, rtol=1e-4)
    _check_case(key1, B=2, S=8, H=32, n_heads=4, q_block=None,
                compute_dtype=jnp.bfloat16, atol=2e-2, rtol=2e-2,
                check_no_attn=True)

    # Case 2: (8,128)-aligned shapes exercising q-tiling (n_q=4), the cached
    #   K/V projections and multi-head-block accumulation (16 heads, hd=32,
    #   head_block=8 -> 2 head blocks).
    _check_case(key2, B=2, S=256, H=512, n_heads=16, q_block=64,
                compute_dtype=jnp.float32, atol=1e-4, rtol=1e-4)
    _check_case(key2, B=2, S=256, H=512, n_heads=16, q_block=64,
                compute_dtype=jnp.bfloat16, atol=2e-2, rtol=2e-2)

    print("KERNEL_OK")
</pallas_src>

<mosaic_0001>
module attributes {stable_mosaic.version = 11 : i64} {
  func.func @_mha_kernel(%arg0: i32, %arg1: i32, %arg2: i32, %arg3: memref<1x8x32xf32, #tpu.memory_space<vmem>>, %arg4: memref<1x8x32xf32, #tpu.memory_space<vmem>>, %arg5: memref<1x8x32xf32, #tpu.memory_space<vmem>>, %arg6: memref<1x32x32xf32, #tpu.memory_space<vmem>>, %arg7: memref<1x1x32xf32, #tpu.memory_space<vmem>>, %arg8: memref<1x32x32xf32, #tpu.memory_space<vmem>>, %arg9: memref<1x1x32xf32, #tpu.memory_space<vmem>>, %arg10: memref<1x32x32xf32, #tpu.memory_space<vmem>>, %arg11: memref<1x1x32xf32, #tpu.memory_space<vmem>>, %arg12: memref<1x32x32xf32, #tpu.memory_space<vmem>>, %arg13: memref<1x32xf32, #tpu.memory_space<vmem>>, %arg14: memref<1x8x32xf32, #tpu.memory_space<vmem>>, %arg15: memref<1x4x8x8xf32, #tpu.memory_space<vmem>>, %arg16: memref<8x32xf32, #tpu.memory_space<vmem>>, %arg17: memref<1x8x32xf32, #tpu.memory_space<vmem>>, %arg18: memref<1x8x32xf32, #tpu.memory_space<vmem>>) attributes {dimension_semantics = [#tpu.dimension_semantics<parallel>, #tpu.dimension_semantics<arbitrary>, #tpu.dimension_semantics<arbitrary>], iteration_bounds = array<i64: 2, 1, 1>, scalar_prefetch = 0 : i64, scratch_operands = 3 : i64, tpu.core_type = #tpu.core_type<tc>, window_params = [{transform_indices = @transform_0, window_bounds = array<i64: 1, 8, 32>}, {transform_indices = @transform_1, window_bounds = array<i64: 1, 8, 32>}, {transform_indices = @transform_2, window_bounds = array<i64: 1, 8, 32>}, {pipeline_mode = #tpu.pipeline_mode<synchronous>, transform_indices = @transform_3, window_bounds = array<i64: 1, 32, 32>}, {pipeline_mode = #tpu.pipeline_mode<synchronous>, transform_indices = @transform_4, window_bounds = array<i64: 1, 1, 32>}, {pipeline_mode = #tpu.pipeline_mode<synchronous>, transform_indices = @transform_5, window_bounds = array<i64: 1, 32, 32>}, {pipeline_mode = #tpu.pipeline_mode<synchronous>, transform_indices = @transform_6, window_bounds = array<i64: 1, 1, 32>}, {pipeline_mode = #tpu.pipeline_mode<synchronous>, transform_indices = @transform_7, window_bounds = array<i64: 1, 32, 32>}, {pipeline_mode = #tpu.pipeline_mode<synchronous>, transform_indices = @transform_8, window_bounds = array<i64: 1, 1, 32>}, {pipeline_mode = #tpu.pipeline_mode<synchronous>, transform_indices = @transform_9, window_bounds = array<i64: 1, 32, 32>}, {pipeline_mode = #tpu.pipeline_mode<synchronous>, transform_indices = @transform_10, window_bounds = array<i64: 1, 32>}, {transform_indices = @transform_11, window_bounds = array<i64: 1, 8, 32>}, {transform_indices = @transform_12, window_bounds = array<i64: 1, 4, 8, 8>}]} {
    %0 = arith.index_cast %arg2 : i32 to index
    %c0 = arith.constant 0 : index
    %c0_0 = arith.constant 0 : index
    %1 = vector.load %arg6[%0, %c0, %c0_0] : memref<1x32x32xf32, #tpu.memory_space<vmem>>, vector<1x32x32xf32>
    %2 = vector.shape_cast %1 : vector<1x32x32xf32> to vector<32x32xf32>
    %3 = arith.index_cast %arg2 : i32 to index
    %c0_1 = arith.constant 0 : index
    %c0_2 = arith.constant 0 : index
    %4 = vector.load %arg7[%3, %c0_1, %c0_2] : memref<1x1x32xf32, #tpu.memory_space<vmem>>, vector<1x1x32xf32>
    %5 = vector.shape_cast %4 : vector<1x1x32xf32> to vector<1x32xf32>
    %6 = arith.index_cast %arg2 : i32 to index
    %c0_3 = arith.constant 0 : index
    %c0_4 = arith.constant 0 : index
    %7 = vector.load %arg12[%6, %c0_3, %c0_4] : memref<1x32x32xf32, #tpu.memory_space<vmem>>, vector<1x32x32xf32>
    %8 = vector.shape_cast %7 : vector<1x32x32xf32> to vector<32x32xf32>
    %c0_5 = arith.constant 0 : index
    %c0_6 = arith.constant 0 : index
    %c0_7 = arith.constant 0 : index
    %9 = vector.load %arg3[%c0_5, %c0_6, %c0_7] : memref<1x8x32xf32, #tpu.memory_space<vmem>>, vector<1x8x32xf32>
    %10 = vector.shape_cast %9 : vector<1x8x32xf32> to vector<8x32xf32>
    %cst = arith.constant dense<0.000000e+00> : vector<8x32xf32>
    %11 = tpu.matmul %10, %2, %cst {dimension_numbers = #tpu.dot_dimension_numbers<[1], [0], [0], [1], [0, 0, 1, 1], [], []>} : vector<8x32xf32>, vector<32x32xf32>, vector<8x32xf32> -> vector<8x32xf32>
    %12 = vector.broadcast %5 : vector<1x32xf32> to vector<8x32xf32>
    %13 = arith.addf %11, %12 : vector<8x32xf32>
    %c0_i32 = arith.constant 0 : i32
    %14 = arith.cmpi eq, %arg1, %c0_i32 : i32
    %15 = arith.extui %14 : i1 to i32
    %c0_i32_8 = arith.constant 0 : i32
    %16 = arith.cmpi ne, %15, %c0_i32_8 : i32
    scf.if %16 {
      %106 = arith.index_cast %arg2 : i32 to index
      %c0_51 = arith.constant 0 : index
      %c0_52 = arith.constant 0 : index
      %107 = vector.load %arg8[%106, %c0_51, %c0_52] : memref<1x32x32xf32, #tpu.memory_space<vmem>>, vector<1x32x32xf32>
      %108 = vector.shape_cast %107 : vector<1x32x32xf32> to vector<32x32xf32>
      %109 = arith.index_cast %arg2 : i32 to index
      %c0_53 = arith.constant 0 : index
      %c0_54 = arith.constant 0 : index
      %110 = vector.load %arg9[%109, %c0_53, %c0_54] : memref<1x1x32xf32, #tpu.memory_space<vmem>>, vector<1x1x32xf32>
      %111 = vector.shape_cast %110 : vector<1x1x32xf32> to vector<1x32xf32>
      %112 = arith.index_cast %arg2 : i32 to index
      %c0_55 = arith.constant 0 : index
      %c0_56 = arith.constant 0 : index
      %113 = vector.load %arg10[%112, %c0_55, %c0_56] : memref<1x32x32xf32, #tpu.memory_space<vmem>>, vector<1x32x32xf32>
      %114 = vector.shape_cast %113 : vector<1x32x32xf32> to vector<32x32xf32>
      %115 = arith.index_cast %arg2 : i32 to index
      %c0_57 = arith.constant 0 : index
      %c0_58 = arith.constant 0 : index
      %116 = vector.load %arg11[%115, %c0_57, %c0_58] : memref<1x1x32xf32, #tpu.memory_space<vmem>>, vector<1x1x32xf32>
      %117 = vector.shape_cast %116 : vector<1x1x32xf32> to vector<1x32xf32>
      %c0_59 = arith.constant 0 : index
      %c0_60 = arith.constant 0 : index
      %c0_61 = arith.constant 0 : index
      %118 = vector.load %arg4[%c0_59, %c0_60, %c0_61] : memref<1x8x32xf32, #tpu.memory_space<vmem>>, vector<1x8x32xf32>
      %119 = vector.shape_cast %118 : vector<1x8x32xf32> to vector<8x32xf32>
      %cst_62 = arith.constant dense<0.000000e+00> : vector<8x32xf32>
      %120 = tpu.matmul %119, %108, %cst_62 {dimension_numbers = #tpu.dot_dimension_numbers<[1], [0], [0], [1], [0, 0, 1, 1], [], []>} : vector<8x32xf32>, vector<32x32xf32>, vector<8x32xf32> -> vector<8x32xf32>
      %121 = vector.broadcast %111 : vector<1x32xf32> to vector<8x32xf32>
      %122 = arith.addf %120, %121 : vector<8x32xf32>
      %c0_63 = arith.constant 0 : index
      %c0_64 = arith.constant 0 : index
      %c0_65 = arith.constant 0 : index
      %123 = vector.load %arg5[%c0_63, %c0_64, %c0_65] : memref<1x8x32xf32, #tpu.memory_space<vmem>>, vector<1x8x32xf32>
      %124 = vector.shape_cast %123 : vector<1x8x32xf32> to vector<8x32xf32>
      %cst_66 = arith.constant dense<0.000000e+00> : vector<8x32xf32>
      %125 = tpu.matmul %124, %114, %cst_66 {dimension_numbers = #tpu.dot_dimension_numbers<[1], [0], [0], [1], [0, 0, 1, 1], [], []>} : vector<8x32xf32>, vector<32x32xf32>, vector<8x32xf32> -> vector<8x32xf32>
      %126 = vector.broadcast %117 : vector<1x32xf32> to vector<8x32xf32>
      %127 = arith.addf %125, %126 : vector<8x32xf32>
      %128 = arith.index_cast %arg2 : i32 to index
      %c0_67 = arith.constant 0 : index
      %c0_68 = arith.constant 0 : index
      %129 = vector.load %arg17[%128, %c0_67, %c0_68] : memref<1x8x32xf32, #tpu.memory_space<vmem>>, vector<1x8x32xf32>
      %130 = vector.shape_cast %129 : vector<1x8x32xf32> to vector<8x32xf32>
      %131 = vector.shape_cast %122 : vector<8x32xf32> to vector<1x8x32xf32>
      tpu.vector_store %arg17[%128, %c0_67, %c0_68], %131 {strides = array<i32>} : memref<1x8x32xf32, #tpu.memory_space<vmem>>, vector<1x8x32xf32>,
      %132 = arith.index_cast %arg2 : i32 to index
      %c0_69 = arith.constant 0 : index
      %c0_70 = arith.constant 0 : index
      %133 = vector.load %arg18[%132, %c0_69, %c0_70] : memref<1x8x32xf32, #tpu.memory_space<vmem>>, vector<1x8x32xf32>
      %134 = vector.shape_cast %133 : vector<1x8x32xf32> to vector<8x32xf32>
      %135 = vector.shape_cast %127 : vector<8x32xf32> to vector<1x8x32xf32>
      tpu.vector_store %arg18[%132, %c0_69, %c0_70], %135 {strides = array<i32>} : memref<1x8x32xf32, #tpu.memory_space<vmem>>, vector<1x8x32xf32>,
    } else {
    }
    %17 = arith.index_cast %arg2 : i32 to index
    %c0_9 = arith.constant 0 : index
    %c0_10 = arith.constant 0 : index
    %18 = vector.load %arg17[%17, %c0_9, %c0_10] : memref<1x8x32xf32, #tpu.memory_space<vmem>>, vector<1x8x32xf32>
    %19 = vector.shape_cast %18 : vector<1x8x32xf32> to vector<8x32xf32>
    %20 = arith.index_cast %arg2 : i32 to index
    %c0_11 = arith.constant 0 : index
    %c0_12 = arith.constant 0 : index
    %21 = vector.load %arg18[%20, %c0_11, %c0_12] : memref<1x8x32xf32, #tpu.memory_space<vmem>>, vector<1x8x32xf32>
    %22 = vector.shape_cast %21 : vector<1x8x32xf32> to vector<8x32xf32>
    %23 = vector.extract_strided_slice %13 {offsets = [0, 0], sizes = [8, 8], strides = [1, 1]} : vector<8x32xf32> to vector<8x8xf32>
    %24 = vector.extract_strided_slice %19 {offsets = [0, 0], sizes = [8, 8], strides = [1, 1]} : vector<8x32xf32> to vector<8x8xf32>
    %25 = vector.extract_strided_slice %22 {offsets = [0, 0], sizes = [8, 8], strides = [1, 1]} : vector<8x32xf32> to vector<8x8xf32>
    %cst_13 = arith.constant dense<0.000000e+00> : vector<8x8xf32>
    %26 = tpu.matmul %23, %24, %cst_13 {dimension_numbers = #tpu.dot_dimension_numbers<[1], [1], [0], [0], [0, 0, 1, 0], [], []>} : vector<8x8xf32>, vector<8x8xf32>, vector<8x8xf32> -> vector<8x8xf32>
    %cst_14 = arith.constant dense<0xFF800000> : vector<8xf32>
    %27 = vector.multi_reduction <maximumf>, %26, %cst_14 [1] : vector<8x8xf32> to vector<8xf32>
    %28 = vector.shape_cast %27 : vector<8xf32> to vector<8x1xf32>
    %29 = vector.broadcast %28 : vector<8x1xf32> to vector<8x8xf32>
    %30 = arith.subf %26, %29 : vector<8x8xf32>
    %31 = math.exp %30 : vector<8x8xf32>
    %cst_15 = arith.constant dense<0.000000e+00> : vector<8xf32>
    %32 = vector.multi_reduction <add>, %31, %cst_15 [1] : vector<8x8xf32> to vector<8xf32>
    %33 = vector.shape_cast %32 : vector<8xf32> to vector<8x1xf32>
    %34 = tpu.reciprocal %33 : vector<8x1xf32> -> vector<8x1xf32>
    %35 = vector.broadcast %34 : vector<8x1xf32> to vector<8x8xf32>
    %36 = arith.mulf %31, %35 : vector<8x8xf32>
    %c0_16 = arith.constant 0 : index
    %c0_17 = arith.constant 0 : index
    %c0_18 = arith.constant 0 : index
    %c0_19 = arith.constant 0 : index
    %37 = vector.load %arg15[%c0_16, %c0_17, %c0_18, %c0_19] : memref<1x4x8x8xf32, #tpu.memory_space<vmem>>, vector<1x1x8x8xf32>
    %38 = vector.shape_cast %37 : vector<1x1x8x8xf32> to vector<8x8xf32>
    %39 = vector.shape_cast %36 : vector<8x8xf32> to vector<1x1x8x8xf32>
    tpu.vector_store %arg15[%c0_16, %c0_17, %c0_18, %c0_19], %39 {strides = array<i32>} : memref<1x4x8x8xf32, #tpu.memory_space<vmem>>, vector<1x1x8x8xf32>,
    %cst_20 = arith.constant dense<0.000000e+00> : vector<8x8xf32>
    %40 = tpu.matmul %36, %25, %cst_20 {dimension_numbers = #tpu.dot_dimension_numbers<[1], [0], [0], [1], [0, 0, 1, 1], [], []>} : vector<8x8xf32>, vector<8x8xf32>, vector<8x8xf32> -> vector<8x8xf32>
    %41 = vector.extract_strided_slice %13 {offsets = [0, 8], sizes = [8, 8], strides = [1, 1]} : vector<8x32xf32> to vector<8x8xf32>
    %42 = vector.extract_strided_slice %19 {offsets = [0, 8], sizes = [8, 8], strides = [1, 1]} : vector<8x32xf32> to vector<8x8xf32>
    %43 = vector.extract_strided_slice %22 {offsets = [0, 8], sizes = [8, 8], strides = [1, 1]} : vector<8x32xf32> to vector<8x8xf32>
    %cst_21 = arith.constant dense<0.000000e+00> : vector<8x8xf32>
    %44 = tpu.matmul %41, %42, %cst_21 {dimension_numbers = #tpu.dot_dimension_numbers<[1], [1], [0], [0], [0, 0, 1, 0], [], []>} : vector<8x8xf32>, vector<8x8xf32>, vector<8x8xf32> -> vector<8x8xf32>
    %cst_22 = arith.constant dense<0xFF800000> : vector<8xf32>
    %45 = vector.multi_reduction <maximumf>, %44, %cst_22 [1] : vector<8x8xf32> to vector<8xf32>
    %46 = vector.shape_cast %45 : vector<8xf32> to vector<8x1xf32>
    %47 = vector.broadcast %46 : vector<8x1xf32> to vector<8x8xf32>
    %48 = arith.subf %44, %47 : vector<8x8xf32>
    %49 = math.exp %48 : vector<8x8xf32>
    %cst_23 = arith.constant dense<0.000000e+00> : vector<8xf32>
    %50 = vector.multi_reduction <add>, %49, %cst_23 [1] : vector<8x8xf32> to vector<8xf32>
    %51 = vector.shape_cast %50 : vector<8xf32> to vector<8x1xf32>
    %52 = tpu.reciprocal %51 : vector<8x1xf32> -> vector<8x1xf32>
    %53 = vector.broadcast %52 : vector<8x1xf32> to vector<8x8xf32>
    %54 = arith.mulf %49, %53 : vector<8x8xf32>
    %c0_24 = arith.constant 0 : index
    %c1 = arith.constant 1 : index
    %c0_25 = arith.constant 0 : index
    %c0_26 = arith.constant 0 : index
    %55 = vector.load %arg15[%c0_24, %c1, %c0_25, %c0_26] : memref<1x4x8x8xf32, #tpu.memory_space<vmem>>, vector<1x1x8x8xf32>
    %56 = vector.shape_cast %55 : vector<1x1x8x8xf32> to vector<8x8xf32>
    %57 = vector.shape_cast %54 : vector<8x8xf32> to vector<1x1x8x8xf32>
    tpu.vector_store %arg15[%c0_24, %c1, %c0_25, %c0_26], %57 {strides = array<i32>} : memref<1x4x8x8xf32, #tpu.memory_space<vmem>>, vector<1x1x8x8xf32>,
    %cst_27 = arith.constant dense<0.000000e+00> : vector<8x8xf32>
    %58 = tpu.matmul %54, %43, %cst_27 {dimension_numbers = #tpu.dot_dimension_numbers<[1], [0], [0], [1], [0, 0, 1, 1], [], []>} : vector<8x8xf32>, vector<8x8xf32>, vector<8x8xf32> -> vector<8x8xf32>
    %59 = vector.extract_strided_slice %13 {offsets = [0, 16], sizes = [8, 8], strides = [1, 1]} : vector<8x32xf32> to vector<8x8xf32>
    %60 = vector.extract_strided_slice %19 {offsets = [0, 16], sizes = [8, 8], strides = [1, 1]} : vector<8x32xf32> to vector<8x8xf32>
    %61 = vector.extract_strided_slice %22 {offsets = [0, 16], sizes = [8, 8], strides = [1, 1]} : vector<8x32xf32> to vector<8x8xf32>
    %cst_28 = arith.constant dense<0.000000e+00> : vector<8x8xf32>
    %62 = tpu.matmul %59, %60, %cst_28 {dimension_numbers = #tpu.dot_dimension_numbers<[1], [1], [0], [0], [0, 0, 1, 0], [], []>} : vector<8x8xf32>, vector<8x8xf32>, vector<8x8xf32> -> vector<8x8xf32>
    %cst_29 = arith.constant dense<0xFF800000> : vector<8xf32>
    %63 = vector.multi_reduction <maximumf>, %62, %cst_29 [1] : vector<8x8xf32> to vector<8xf32>
    %64 = vector.shape_cast %63 : vector<8xf32> to vector<8x1xf32>
    %65 = vector.broadcast %64 : vector<8x1xf32> to vector<8x8xf32>
    %66 = arith.subf %62, %65 : vector<8x8xf32>
    %67 = math.exp %66 : vector<8x8xf32>
    %cst_30 = arith.constant dense<0.000000e+00> : vector<8xf32>
    %68 = vector.multi_reduction <add>, %67, %cst_30 [1] : vector<8x8xf32> to vector<8xf32>
    %69 = vector.shape_cast %68 : vector<8xf32> to vector<8x1xf32>
    %70 = tpu.reciprocal %69 : vector<8x1xf32> -> vector<8x1xf32>
    %71 = vector.broadcast %70 : vector<8x1xf32> to vector<8x8xf32>
    %72 = arith.mulf %67, %71 : vector<8x8xf32>
    %c0_31 = arith.constant 0 : index
    %c2 = arith.constant 2 : index
    %c0_32 = arith.constant 0 : index
    %c0_33 = arith.constant 0 : index
    %73 = vector.load %arg15[%c0_31, %c2, %c0_32, %c0_33] : memref<1x4x8x8xf32, #tpu.memory_space<vmem>>, vector<1x1x8x8xf32>
    %74 = vector.shape_cast %73 : vector<1x1x8x8xf32> to vector<8x8xf32>
    %75 = vector.shape_cast %72 : vector<8x8xf32> to vector<1x1x8x8xf32>
    tpu.vector_store %arg15[%c0_31, %c2, %c0_32, %c0_33], %75 {strides = array<i32>} : memref<1x4x8x8xf32, #tpu.memory_space<vmem>>, vector<1x1x8x8xf32>,
    %cst_34 = arith.constant dense<0.000000e+00> : vector<8x8xf32>
    %76 = tpu.matmul %72, %61, %cst_34 {dimension_numbers = #tpu.dot_dimension_numbers<[1], [0], [0], [1], [0, 0, 1, 1], [], []>} : vector<8x8xf32>, vector<8x8xf32>, vector<8x8xf32> -> vector<8x8xf32>
    %77 = vector.extract_strided_slice %13 {offsets = [0, 24], sizes = [8, 8], strides = [1, 1]} : vector<8x32xf32> to vector<8x8xf32>
    %78 = vector.extract_strided_slice %19 {offsets = [0, 24], sizes = [8, 8], strides = [1, 1]} : vector<8x32xf32> to vector<8x8xf32>
    %79 = vector.extract_strided_slice %22 {offsets = [0, 24], sizes = [8, 8], strides = [1, 1]} : vector<8x32xf32> to vector<8x8xf32>
    %cst_35 = arith.constant dense<0.000000e+00> : vector<8x8xf32>
    %80 = tpu.matmul %77, %78, %cst_35 {dimension_numbers = #tpu.dot_dimension_numbers<[1], [1], [0], [0], [0, 0, 1, 0], [], []>} : vector<8x8xf32>, vector<8x8xf32>, vector<8x8xf32> -> vector<8x8xf32>
    %cst_36 = arith.constant dense<0xFF800000> : vector<8xf32>
    %81 = vector.multi_reduction <maximumf>, %80, %cst_36 [1] : vector<8x8xf32> to vector<8xf32>
    %82 = vector.shape_cast %81 : vector<8xf32> to vector<8x1xf32>
    %83 = vector.broadcast %82 : vector<8x1xf32> to vector<8x8xf32>
    %84 = arith.subf %80, %83 : vector<8x8xf32>
    %85 = math.exp %84 : vector<8x8xf32>
    %cst_37 = arith.constant dense<0.000000e+00> : vector<8xf32>
    %86 = vector.multi_reduction <add>, %85, %cst_37 [1] : vector<8x8xf32> to vector<8xf32>
    %87 = vector.shape_cast %86 : vector<8xf32> to vector<8x1xf32>
    %88 = tpu.reciprocal %87 : vector<8x1xf32> -> vector<8x1xf32>
    %89 = vector.broadcast %88 : vector<8x1xf32> to vector<8x8xf32>
    %90 = arith.mulf %85, %89 : vector<8x8xf32>
    %c0_38 = arith.constant 0 : index
    %c3 = arith.constant 3 : index
    %c0_39 = arith.constant 0 : index
    %c0_40 = arith.constant 0 : index
    %91 = vector.load %arg15[%c0_38, %c3, %c0_39, %c0_40] : memref<1x4x8x8xf32, #tpu.memory_space<vmem>>, vector<1x1x8x8xf32>
    %92 = vector.shape_cast %91 : vector<1x1x8x8xf32> to vector<8x8xf32>
    %93 = vector.shape_cast %90 : vector<8x8xf32> to vector<1x1x8x8xf32>
    tpu.vector_store %arg15[%c0_38, %c3, %c0_39, %c0_40], %93 {strides = array<i32>} : memref<1x4x8x8xf32, #tpu.memory_space<vmem>>, vector<1x1x8x8xf32>,
    %cst_41 = arith.constant dense<0.000000e+00> : vector<8x8xf32>
    %94 = tpu.matmul %90, %79, %cst_41 {dimension_numbers = #tpu.dot_dimension_numbers<[1], [0], [0], [1], [0, 0, 1, 1], [], []>} : vector<8x8xf32>, vector<8x8xf32>, vector<8x8xf32> -> vector<8x8xf32>
    %95 = tpu.concatenate %40, %58, %76, %94 in 1 : vector<8x8xf32>, vector<8x8xf32>, vector<8x8xf32>, vector<8x8xf32> -> vector<8x32xf32>
    %c0_i32_42 = arith.constant 0 : i32
    %96 = arith.cmpi eq, %arg2, %c0_i32_42 : i32
    %97 = arith.extui %96 : i1 to i32
    %c0_i32_43 = arith.constant 0 : i32
    %98 = arith.cmpi ne, %97, %c0_i32_43 : i32
    scf.if %98 {
      %cst_51 = arith.constant 0.000000e+00 : f32
      %106 = vector.broadcast %cst_51 : f32 to vector<8x32xf32>
      %c0_52 = arith.constant 0 : index
      %c0_53 = arith.constant 0 : index
      %107 = vector.load %arg16[%c0_52, %c0_53] : memref<8x32xf32, #tpu.memory_space<vmem>>, vector<8x32xf32>
      tpu.vector_store %arg16[%c0_52, %c0_53], %106 {strides = array<i32>} : memref<8x32xf32, #tpu.memory_space<vmem>>, vector<8x32xf32>,
    } else {
    }
    %c0_44 = arith.constant 0 : index
    %c0_45 = arith.constant 0 : index
    %99 = vector.load %arg16[%c0_44, %c0_45] : memref<8x32xf32, #tpu.memory_space<vmem>>, vector<8x32xf32>
    %cst_46 = arith.constant dense<0.000000e+00> : vector<8x32xf32>
    %100 = tpu.matmul %95, %8, %cst_46 {dimension_numbers = #tpu.dot_dimension_numbers<[1], [0], [0], [1], [0, 0, 1, 1], [], []>} : vector<8x32xf32>, vector<32x32xf32>, vector<8x32xf32> -> vector<8x32xf32>
    %101 = arith.addf %99, %100 : vector<8x32xf32>
    %c0_47 = arith.constant 0 : index
    %c0_48 = arith.constant 0 : index
    %102 = vector.load %arg16[%c0_47, %c0_48] : memref<8x32xf32, #tpu.memory_space<vmem>>, vector<8x32xf32>
    tpu.vector_store %arg16[%c0_47, %c0_48], %101 {strides = array<i32>} : memref<8x32xf32, #tpu.memory_space<vmem>>, vector<8x32xf32>,
    %c0_i32_49 = arith.constant 0 : i32
    %103 = arith.cmpi eq, %arg2, %c0_i32_49 : i32
    %104 = arith.extui %103 : i1 to i32
    %c0_i32_50 = arith.constant 0 : i32
    %105 = arith.cmpi ne, %104, %c0_i32_50 : i32
    scf.if %105 {
      %c0_51 = arith.constant 0 : index
      %c0_52 = arith.constant 0 : index
      %106 = vector.load %arg16[%c0_51, %c0_52] : memref<8x32xf32, #tpu.memory_space<vmem>>, vector<8x32xf32>
      %c0_53 = arith.constant 0 : index
      %c0_54 = arith.constant 0 : index
      %107 = vector.load %arg13[%c0_53, %c0_54] : memref<1x32xf32, #tpu.memory_space<vmem>>, vector<1x32xf32>
      %108 = vector.broadcast %107 : vector<1x32xf32> to vector<8x32xf32>
      %109 = arith.addf %106, %108 : vector<8x32xf32>
      %c0_55 = arith.constant 0 : index
      %c0_56 = arith.constant 0 : index
      %c0_57 = arith.constant 0 : index
      %110 = vector.load %arg14[%c0_55, %c0_56, %c0_57] : memref<1x8x32xf32, #tpu.memory_space<vmem>>, vector<1x8x32xf32>
      %111 = vector.shape_cast %110 : vector<1x8x32xf32> to vector<8x32xf32>
      %112 = vector.shape_cast %109 : vector<8x32xf32> to vector<1x8x32xf32>
      tpu.vector_store %arg14[%c0_55, %c0_56, %c0_57], %112 {strides = array<i32>} : memref<1x8x32xf32, #tpu.memory_space<vmem>>, vector<1x8x32xf32>,
    } else {
    }
    return
  }
  func.func @transform_0(%arg0: i32, %arg1: i32, %arg2: i32) -> (i32, i32, i32) {
    %c0_i32 = arith.constant 0 : i32
    %c0_i32_0 = arith.constant 0 : i32
    return %arg0, %arg1, %c0_i32 : i32, i32, i32
  }
  func.func @transform_1(%arg0: i32, %arg1: i32, %arg2: i32) -> (i32, i32, i32) {
    %c0_i32 = arith.constant 0 : i32
    %c0_i32_0 = arith.constant 0 : i32
    %c0_i32_1 = arith.constant 0 : i32
    return %arg0, %c0_i32, %c0_i32_0 : i32, i32, i32
  }
  func.func @transform_2(%arg0: i32, %arg1: i32, %arg2: i32) -> (i32, i32, i32) {
    %c0_i32 = arith.constant 0 : i32
    %c0_i32_0 = arith.constant 0 : i32
    %c0_i32_1 = arith.constant 0 : i32
    return %arg0, %c0_i32, %c0_i32_0 : i32, i32, i32
  }
  func.func @transform_3(%arg0: i32, %arg1: i32, %arg2: i32) -> (i32, i32, i32) {
    %c0_i32 = arith.constant 0 : i32
    %c0_i32_0 = arith.constant 0 : i32
    %c0_i32_1 = arith.constant 0 : i32
    %c0_i32_2 = arith.constant 0 : i32
    return %c0_i32, %c0_i32_0, %c0_i32_1 : i32, i32, i32
  }
  func.func @transform_4(%arg0: i32, %arg1: i32, %arg2: i32) -> (i32, i32, i32) {
    %c0_i32 = arith.constant 0 : i32
    %c0_i32_0 = arith.constant 0 : i32
    %c0_i32_1 = arith.constant 0 : i32
    %c0_i32_2 = arith.constant 0 : i32
    return %c0_i32, %c0_i32_0, %c0_i32_1 : i32, i32, i32
  }
  func.func @transform_5(%arg0: i32, %arg1: i32, %arg2: i32) -> (i32, i32, i32) {
    %c0_i32 = arith.constant 0 : i32
    %c0_i32_0 = arith.constant 0 : i32
    %c0_i32_1 = arith.constant 0 : i32
    %c0_i32_2 = arith.constant 0 : i32
    return %c0_i32, %c0_i32_0, %c0_i32_1 : i32, i32, i32
  }
  func.func @transform_6(%arg0: i32, %arg1: i32, %arg2: i32) -> (i32, i32, i32) {
    %c0_i32 = arith.constant 0 : i32
    %c0_i32_0 = arith.constant 0 : i32
    %c0_i32_1 = arith.constant 0 : i32
    %c0_i32_2 = arith.constant 0 : i32
    return %c0_i32, %c0_i32_0, %c0_i32_1 : i32, i32, i32
  }
  func.func @transform_7(%arg0: i32, %arg1: i32, %arg2: i32) -> (i32, i32, i32) {
    %c0_i32 = arith.constant 0 : i32
    %c0_i32_0 = arith.constant 0 : i32
    %c0_i32_1 = arith.constant 0 : i32
    %c0_i32_2 = arith.constant 0 : i32
    return %c0_i32, %c0_i32_0, %c0_i32_1 : i32, i32, i32
  }
  func.func @transform_8(%arg0: i32, %arg1: i32, %arg2: i32) -> (i32, i32, i32) {
    %c0_i32 = arith.constant 0 : i32
    %c0_i32_0 = arith.constant 0 : i32
    %c0_i32_1 = arith.constant 0 : i32
    %c0_i32_2 = arith.constant 0 : i32
    return %c0_i32, %c0_i32_0, %c0_i32_1 : i32, i32, i32
  }
  func.func @transform_9(%arg0: i32, %arg1: i32, %arg2: i32) -> (i32, i32, i32) {
    %c0_i32 = arith.constant 0 : i32
    %c0_i32_0 = arith.constant 0 : i32
    %c0_i32_1 = arith.constant 0 : i32
    %c0_i32_2 = arith.constant 0 : i32
    return %c0_i32, %c0_i32_0, %c0_i32_1 : i32, i32, i32
  }
  func.func @transform_10(%arg0: i32, %arg1: i32, %arg2: i32) -> (i32, i32) {
    %c0_i32 = arith.constant 0 : i32
    %c0_i32_0 = arith.constant 0 : i32
    %c0_i32_1 = arith.constant 0 : i32
    return %c0_i32, %c0_i32_0 : i32, i32
  }
  func.func @transform_11(%arg0: i32, %arg1: i32, %arg2: i32) -> (i32, i32, i32) {
    %c0_i32 = arith.constant 0 : i32
    %c0_i32_0 = arith.constant 0 : i32
    return %arg0, %arg1, %c0_i32 : i32, i32, i32
  }
  func.func @transform_12(%arg0: i32, %arg1: i32, %arg2: i32) -> (i32, i32, i32, i32) {
    %c0_i32 = arith.constant 0 : i32
    %c0_i32_0 = arith.constant 0 : i32
    return %arg0, %arg2, %arg1, %c0_i32 : i32, i32, i32, i32
  }
}

</mosaic_0001>

<llo_original>
// kernel: tpu_custom_call.1
$region0: #{tpu_custom_call.1}
  #allocation0 [shape = 'u32[]', space=smem, size = 0x4, offset = 0x4, fixed_abs, tag = 'smem constant byte address 0x4 - core index']
  #allocation1 [shape = 'u32[144,128]{1,0:T(1,128)}', space=vmem, size = 0x12000, scoped, tag = 'internal scratch']
  #allocation2 [shape = 'f32[8,32]{1,0:T(8,128)}', space=vmem, size = 0x1000, scoped, tag = 'scratch operand']
  #allocation3 [shape = 'f32[1,8,32]{2,1,0:T(8,128)}', space=vmem, size = 0x1000, scoped, tag = 'scratch operand']
  #allocation4 [shape = 'f32[1,8,32]{2,1,0:T(8,128)}', space=vmem, size = 0x1000, scoped, tag = 'scratch operand']
  %s0 = inlined_call_operand.hbm [shape: f32[2,8,32], index: 0, kind: input, shape index: {}]
  %s1 = inlined_call_operand.hbm [shape: f32[2,8,32], index: 1, kind: input, shape index: {}]
  %s2 = inlined_call_operand.hbm [shape: f32[2,8,32], index: 2, kind: input, shape index: {}]
  %s3 = inlined_call_operand.hbm [shape: f32[1,32,32], index: 3, kind: input, shape index: {}]
  %s4 = inlined_call_operand.vmem [shape: f32[1,1,32], index: 4, kind: input, shape index: {}]
  %s5 = inlined_call_operand.hbm [shape: f32[1,32,32], index: 5, kind: input, shape index: {}]
  %s6 = inlined_call_operand.vmem [shape: f32[1,1,32], index: 6, kind: input, shape index: {}]
  %s7 = inlined_call_operand.hbm [shape: f32[1,32,32], index: 7, kind: input, shape index: {}]
  %s8 = inlined_call_operand.hbm [shape: f32[1,1,32], index: 8, kind: input, shape index: {}]
  %s9 = inlined_call_operand.vmem [shape: f32[1,32,32], index: 9, kind: input, shape index: {}]
  %s10 = inlined_call_operand.vmem [shape: f32[1,32], index: 10, kind: input, shape index: {}]
  %s11 = inlined_call_operand.hbm [shape: f32[2,8,32], index: 11, kind: output, shape index: {0}]
  %s12 = inlined_call_operand.hbm [shape: f32[2,4,8,8], index: 12, kind: output, shape index: {1}]
  %13 = xla_tuple %s11, %s12
  %s14 = sld [smem:[#allocation0]]
  $region125: #{tpu_custom_call.1} parent=0
    _
  %s16 = ssub.s32 1, %s14
  %s17 = scalar_select 0, %s16, %s14
  $region1: #{tpu_custom_call.1} parent=0
    #allocation5 [shape = 'u8[8192]{0}', space=vmem, size = 0x2000, scoped, tag = 'input window, operand 0']
    #allocation6 [shape = 's32[2]{0}', space=sflag, size = 0x8, scoped, tag = 'scoped memory for tpu_custom_call.1']
    #allocation7 [shape = 's32[2]{0}', space=sflag, size = 0x8, scoped, tag = 'scoped memory for tpu_custom_call.1']
    #allocation8 [shape = 'u8[8192]{0}', space=vmem, size = 0x2000, scoped, tag = 'input window, operand 1']
    #allocation9 [shape = 's32[2]{0}', space=sflag, size = 0x8, scoped, tag = 'scoped memory for tpu_custom_call.1']
    #allocation10 [shape = 'u8[8192]{0}', space=vmem, size = 0x2000, scoped, tag = 'input window, operand 2']
    #allocation11 [shape = 'u8[16384]{0}', space=vmem, size = 0x4000, scoped, tag = 'input window, operand 3, single buffered']
    #allocation12 [shape = 's32[1]{0}', space=sflag, size = 0x4, scoped, tag = 'scoped memory for tpu_custom_call.1']
    #allocation13 [shape = 'u8[16384]{0}', space=vmem, size = 0x4000, scoped, tag = 'input window, operand 5, single buffered']
    #allocation14 [shape = 'u8[16384]{0}', space=vmem, size = 0x4000, scoped, tag = 'input window, operand 7, single buffered']
    #allocation15 [shape = 's32[1]{0}', space=sflag, size = 0x4, scoped, tag = 'scoped memory for tpu_custom_call.1']
    #allocation16 [shape = 'u8[512]{0}', space=vmem, size = 0x400, scoped, tag = 'input window, operand 8, single buffered']
    #allocation17 [shape = 'u8[8192]{0}', space=vmem, size = 0x2000, scoped, tag = 'output window, operand 0']
    #allocation18 [shape = 'u8[32768]{0}', space=vmem, size = 0x8000, scoped, tag = 'output window, operand 1']
    #allocation19 [shape = 's32[2]{0}', space=sflag, size = 0x8, scoped, tag = 'scoped memory for tpu_custom_call.1']
    %18 = vsyncpa [#allocation6], 0
    %s19 = scalar_lea.sflag [#allocation6], 1
    %20 = vsyncpa %s19, 0
    %21 = vsyncpa [#allocation9], 0
    %s22 = scalar_lea.sflag [#allocation9], 1
    %23 = vsyncpa %s22, 0
    %24 = vsyncpa [#allocation12], 0
    %25 = vsyncpa [#allocation15], 0
    %26 = vsyncpa [#allocation7], 0
    %s27 = scalar_lea.sflag [#allocation7], 1
    %28 = vsyncpa %s27, 0
    %29 = vsyncpa [#allocation19], 0
    %s30 = scalar_lea.sflag [#allocation19], 1
    %31 = vsyncpa %s30, 0
    loop: start=0, step=1, limit=4
    $region2: #{tpu_custom_call.1} parent=1 // loop_pre_header
      _
    $region3: #{tpu_custom_call.1} parent=1 // loop_header
      %s33 = sphi 0, %s37
      %p34 = scmp.ge.s32.totalorder %s33, 4
      %s40 = sphi 0, %s59
      %s41 = sphi 0, %s55
      %s42 = sphi 0, %s51
      %s43 = sphi 0, %s40
      %s44 = sphi 0, %s41
      %s45 = sphi 0, %s42
      %s46 = sphi 0, %s43
      %s47 = sphi 0, %s44
      %s48 = sphi 0, %s45
      %s64 = sphi 0, %s66
      %s67 = sphi 0, %s64
      %s68 = sphi 0, %s67
      %s84 = sphi 0, %s68
      %s90 = sphi 0, %s92
      %s93 = sphi 0, %s90
      %s94 = sphi 0, %s93
      %s110 = sphi 0, %s94
      %s116 = sphi 0, %s118
      %s119 = sphi 0, %s116
      %s120 = sphi 0, %s119
      %s136 = sphi 0, %s120
      %s140 = sphi 0, %s140
      %s142 = sphi 0, %s140
      %s143 = sphi 0, %s142
      %s157 = sphi 0, %s143
      %s161 = sphi 0, %s161
      %s163 = sphi 0, %s161
      %s164 = sphi 0, %s163
      %s178 = sphi 0, %s164
      %s182 = sphi 0, %s182
      %s184 = sphi 0, %s182
      %s185 = sphi 0, %s184
      %s199 = sphi 0, %s185
      %s203 = sphi 0, %s203
      %s205 = sphi 0, %s203
      %s206 = sphi 0, %s205
      %s220 = sphi 0, %s206
      %s224 = sphi 0, %s224
      %s226 = sphi 0, %s224
      %s227 = sphi 0, %s226
      %s241 = sphi 0, %s227
      %s245 = sphi 0, %s245
      %s247 = sphi 0, %s245
      %s248 = sphi 0, %s247
      %s262 = sphi 0, %s248
      %s266 = sphi 0, %s266
      %s268 = sphi 0, %s266
      %s269 = sphi 0, %s268
      %s283 = sphi 0, %s269
      %s287 = sphi 0, %s287
      %s289 = sphi 0, %s287
      %s290 = sphi 0, %s289
      %s304 = sphi 0, %s290
      %s312 = sphi 0, %s314
      %s315 = sphi 0, %s312
      %s316 = sphi 0, %s315
      %s332 = sphi 0, %s316
      %s342 = sphi 0, %s344
      %s345 = sphi 0, %s342
      %s346 = sphi 0, %s345
      %s362 = sphi 0, %s346
    $region4: #{tpu_custom_call.1} parent=1 // loop_header_branch
      %36 = sbr.rel (%p34) target = $region8
    $region5: #{tpu_custom_call.1} parent=1 // loop_body
      %s38 = ssub.s32 %s33, 1
      %s39 = ssub.s32 %s33, 2
      %s49 = sadd.s32 1, %s42
      %p50 = scmp.ge.s32.totalorder %s49, 1
      %s51 = scalar_select %p50, 0, %s49
      %s52 = sadd.s32 1, %s41
      %s53 = scalar_select %p50, %s52, %s41
      %p54 = scmp.ge.s32.totalorder %s53, 1
      %s55 = scalar_select %p54, 0, %s53
      %s56 = sadd.s32 1, %s40
      %s57 = scalar_select %p54, %s56, %s40
      %p58 = scmp.ge.s32.totalorder %s57, 2
      %s59 = scalar_select %p58, 0, %s57
      %s60 = ssub.s32 %s40, %s59
      %s61 = ssub.s32 %s41, %s55
      %s62 = sor.u32 %s60, %s61
      %p63 = scmp.eq.s32.totalorder %s62, 0
      %s65 = sadd.s32 %s64, 1
      %s66 = scalar_select %p63, %s64, %s65
      %p69 = pneg %p63
      %p70 = scmp.eq.s32.totalorder %s33, 1
      %p71 = por %p69, %p70
      %p72 = scmp.ne.s32.totalorder %s64, %s67
      %p73 = scmp.eq.s32.totalorder %s33, 0
      %p74 = por %p72, %p73
      %p75 = scmp.ne.s32.totalorder %s64, %s67
      %p76 = scmp.eq.s32.totalorder %s38, 1
      %p77 = por %p75, %p76
      %p78 = scmp.ne.s32.totalorder %s67, %s68
      %p79 = scmp.eq.s32.totalorder %s38, 0
      %p80 = por %p78, %p79
      %p81 = scmp.ne.s32.totalorder %s67, %s68
      %p82 = scmp.eq.s32.totalorder %s39, 1
      %p83 = por %p81, %p82
      %p85 = scmp.ne.s32.totalorder %s68, %s84
      %p86 = scmp.eq.s32.totalorder %s39, 0
      %p87 = por %p85, %p86
      %s88 = ssub.s32 %s40, %s59
      %p89 = scmp.eq.s32.totalorder %s88, 0
      %s91 = sadd.s32 %s90, 1
      %s92 = scalar_select %p89, %s90, %s91
      %p95 = pneg %p89
      %p96 = scmp.eq.s32.totalorder %s33, 1
      %p97 = por %p95, %p96
      %p98 = scmp.ne.s32.totalorder %s90, %s93
      %p99 = scmp.eq.s32.totalorder %s33, 0
      %p100 = por %p98, %p99
      %p101 = scmp.ne.s32.totalorder %s90, %s93
      %p102 = scmp.eq.s32.totalorder %s38, 1
      %p103 = por %p101, %p102
      %p104 = scmp.ne.s32.totalorder %s93, %s94
      %p105 = scmp.eq.s32.totalorder %s38, 0
      %p106 = por %p104, %p105
      %p107 = scmp.ne.s32.totalorder %s93, %s94
      %p108 = scmp.eq.s32.totalorder %s39, 1
      %p109 = por %p107, %p108
      %p111 = scmp.ne.s32.totalorder %s94, %s110
      %p112 = scmp.eq.s32.totalorder %s39, 0
      %p113 = por %p111, %p112
      %s114 = ssub.s32 %s40, %s59
      %p115 = scmp.eq.s32.totalorder %s114, 0
      %s117 = sadd.s32 %s116, 1
      %s118 = scalar_select %p115, %s116, %s117
      %p121 = pneg %p115
      %p122 = scmp.eq.s32.totalorder %s33, 1
      %p123 = por %p121, %p122
      %p124 = scmp.ne.s32.totalorder %s116, %s119
      %p125 = scmp.eq.s32.totalorder %s33, 0
      %p126 = por %p124, %p125
      %p127 = scmp.ne.s32.totalorder %s116, %s119
      %p128 = scmp.eq.s32.totalorder %s38, 1
      %p129 = por %p127, %p128
      %p130 = scmp.ne.s32.totalorder %s119, %s120
      %p131 = scmp.eq.s32.totalorder %s38, 0
      %p132 = por %p130, %p131
      %p133 = scmp.ne.s32.totalorder %s119, %s120
      %p134 = scmp.eq.s32.totalorder %s39, 1
      %p135 = por %p133, %p134
      %p137 = scmp.ne.s32.totalorder %s120, %s136
      %p138 = scmp.eq.s32.totalorder %s39, 0
      %p139 = por %p137, %p138
      %s141 = sadd.s32 %s140, 1
      %p144 = scmp.eq.s32.totalorder %s33, 1
      %p145 = scmp.ne.s32.totalorder %s140, %s142
      %p146 = scmp.eq.s32.totalorder %s33, 0
      %p147 = por %p145, %p146
      %p148 = scmp.ne.s32.totalorder %s140, %s142
      %p149 = scmp.eq.s32.totalorder %s38, 1
      %p150 = por %p148, %p149
      %p151 = scmp.ne.s32.totalorder %s142, %s143
      %p152 = scmp.eq.s32.totalorder %s38, 0
      %p153 = por %p151, %p152
      %p154 = scmp.ne.s32.totalorder %s142, %s143
      %p155 = scmp.eq.s32.totalorder %s39, 1
      %p156 = por %p154, %p155
      %p158 = scmp.ne.s32.totalorder %s143, %s157
      %p159 = scmp.eq.s32.totalorder %s39, 0
      %p160 = por %p158, %p159
      %s162 = sadd.s32 %s161, 1
      %p165 = scmp.eq.s32.totalorder %s33, 1
      %p166 = scmp.ne.s32.totalorder %s161, %s163
      %p167 = scmp.eq.s32.totalorder %s33, 0
      %p168 = por %p166, %p167
      %p169 = scmp.ne.s32.totalorder %s161, %s163
      %p170 = scmp.eq.s32.totalorder %s38, 1
      %p171 = por %p169, %p170
      %p172 = scmp.ne.s32.totalorder %s163, %s164
      %p173 = scmp.eq.s32.totalorder %s38, 0
      %p174 = por %p172, %p173
      %p175 = scmp.ne.s32.totalorder %s163, %s164
      %p176 = scmp.eq.s32.totalorder %s39, 1
      %p177 = por %p175, %p176
      %p179 = scmp.ne.s32.totalorder %s164, %s178
      %p180 = scmp.eq.s32.totalorder %s39, 0
      %p181 = por %p179, %p180
      %s183 = sadd.s32 %s182, 1
      %p186 = scmp.eq.s32.totalorder %s33, 1
      %p187 = scmp.ne.s32.totalorder %s182, %s184
      %p188 = scmp.eq.s32.totalorder %s33, 0
      %p189 = por %p187, %p188
      %p190 = scmp.ne.s32.totalorder %s182, %s184
      %p191 = scmp.eq.s32.totalorder %s38, 1
      %p192 = por %p190, %p191
      %p193 = scmp.ne.s32.totalorder %s184, %s185
      %p194 = scmp.eq.s32.totalorder %s38, 0
      %p195 = por %p193, %p194
      %p196 = scmp.ne.s32.totalorder %s184, %s185
      %p197 = scmp.eq.s32.totalorder %s39, 1
      %p198 = por %p196, %p197
      %p200 = scmp.ne.s32.totalorder %s185, %s199
      %p201 = scmp.eq.s32.totalorder %s39, 0
      %p202 = por %p200, %p201
      %s204 = sadd.s32 %s203, 1
      %p207 = scmp.eq.s32.totalorder %s33, 1
      %p208 = scmp.ne.s32.totalorder %s203, %s205
      %p209 = scmp.eq.s32.totalorder %s33, 0
      %p210 = por %p208, %p209
      %p211 = scmp.ne.s32.totalorder %s203, %s205
      %p212 = scmp.eq.s32.totalorder %s38, 1
      %p213 = por %p211, %p212
      %p214 = scmp.ne.s32.totalorder %s205, %s206
      %p215 = scmp.eq.s32.totalorder %s38, 0
      %p216 = por %p214, %p215
      %p217 = scmp.ne.s32.totalorder %s205, %s206
      %p218 = scmp.eq.s32.totalorder %s39, 1
      %p219 = por %p217, %p218
      %p221 = scmp.ne.s32.totalorder %s206, %s220
      %p222 = scmp.eq.s32.totalorder %s39, 0
      %p223 = por %p221, %p222
      %s225 = sadd.s32 %s224, 1
      %p228 = scmp.eq.s32.totalorder %s33, 1
      %p229 = scmp.ne.s32.totalorder %s224, %s226
      %p230 = scmp.eq.s32.totalorder %s33, 0
      %p231 = por %p229, %p230
      %p232 = scmp.ne.s32.totalorder %s224, %s226
      %p233 = scmp.eq.s32.totalorder %s38, 1
      %p234 = por %p232, %p233
      %p235 = scmp.ne.s32.totalorder %s226, %s227
      %p236 = scmp.eq.s32.totalorder %s38, 0
      %p237 = por %p235, %p236
      %p238 = scmp.ne.s32.totalorder %s226, %s227
      %p239 = scmp.eq.s32.totalorder %s39, 1
      %p240 = por %p238, %p239
      %p242 = scmp.ne.s32.totalorder %s227, %s241
      %p243 = scmp.eq.s32.totalorder %s39, 0
      %p244 = por %p242, %p243
      %s246 = sadd.s32 %s245, 1
      %p249 = scmp.eq.s32.totalorder %s33, 1
      %p250 = scmp.ne.s32.totalorder %s245, %s247
      %p251 = scmp.eq.s32.totalorder %s33, 0
      %p252 = por %p250, %p251
      %p253 = scmp.ne.s32.totalorder %s245, %s247
      %p254 = scmp.eq.s32.totalorder %s38, 1
      %p255 = por %p253, %p254
      %p256 = scmp.ne.s32.totalorder %s247, %s248
      %p257 = scmp.eq.s32.totalorder %s38, 0
      %p258 = por %p256, %p257
      %p259 = scmp.ne.s32.totalorder %s247, %s248
      %p260 = scmp.eq.s32.totalorder %s39, 1
      %p261 = por %p259, %p260
      %p263 = scmp.ne.s32.totalorder %s248, %s262
      %p264 = scmp.eq.s32.totalorder %s39, 0
      %p265 = por %p263, %p264
      %s267 = sadd.s32 %s266, 1
      %p270 = scmp.eq.s32.totalorder %s33, 1
      %p271 = scmp.ne.s32.totalorder %s266, %s268
      %p272 = scmp.eq.s32.totalorder %s33, 0
      %p273 = por %p271, %p272
      %p274 = scmp.ne.s32.totalorder %s266, %s268
      %p275 = scmp.eq.s32.totalorder %s38, 1
      %p276 = por %p274, %p275
      %p277 = scmp.ne.s32.totalorder %s268, %s269
      %p278 = scmp.eq.s32.totalorder %s38, 0
      %p279 = por %p277, %p278
      %p280 = scmp.ne.s32.totalorder %s268, %s269
      %p281 = scmp.eq.s32.totalorder %s39, 1
      %p282 = por %p280, %p281
      %p284 = scmp.ne.s32.totalorder %s269, %s283
      %p285 = scmp.eq.s32.totalorder %s39, 0
      %p286 = por %p284, %p285
      %s288 = sadd.s32 %s287, 1
      %p291 = scmp.eq.s32.totalorder %s33, 1
      %p292 = scmp.ne.s32.totalorder %s287, %s289
      %p293 = scmp.eq.s32.totalorder %s33, 0
      %p294 = por %p292, %p293
      %p295 = scmp.ne.s32.totalorder %s287, %s289
      %p296 = scmp.eq.s32.totalorder %s38, 1
      %p297 = por %p295, %p296
      %p298 = scmp.ne.s32.totalorder %s289, %s290
      %p299 = scmp.eq.s32.totalorder %s38, 0
      %p300 = por %p298, %p299
      %p301 = scmp.ne.s32.totalorder %s289, %s290
      %p302 = scmp.eq.s32.totalorder %s39, 1
      %p303 = por %p301, %p302
      %p305 = scmp.ne.s32.totalorder %s290, %s304
      %p306 = scmp.eq.s32.totalorder %s39, 0
      %p307 = por %p305, %p306
      %s308 = ssub.s32 %s40, %s59
      %s309 = ssub.s32 %s41, %s55
      %s310 = sor.u32 %s308, %s309
      %p311 = scmp.eq.s32.totalorder %s310, 0
      %s313 = sadd.s32 %s312, 1
      %s314 = scalar_select %p311, %s312, %s313
      %p317 = pneg %p311
      %p318 = scmp.eq.s32.totalorder %s33, 1
      %p319 = por %p317, %p318
      %p320 = scmp.ne.s32.totalorder %s312, %s315
      %p321 = scmp.eq.s32.totalorder %s33, 0
      %p322 = por %p320, %p321
      %p323 = scmp.ne.s32.totalorder %s312, %s315
      %p324 = scmp.eq.s32.totalorder %s38, 1
      %p325 = por %p323, %p324
      %p326 = scmp.ne.s32.totalorder %s315, %s316
      %p327 = scmp.eq.s32.totalorder %s38, 0
      %p328 = por %p326, %p327
      %p329 = scmp.ne.s32.totalorder %s315, %s316
      %p330 = scmp.eq.s32.totalorder %s39, 1
      %p331 = por %p329, %p330
      %p333 = scmp.ne.s32.totalorder %s316, %s332
      %p334 = scmp.eq.s32.totalorder %s39, 0
      %p335 = por %p333, %p334
      %s336 = ssub.s32 %s40, %s59
      %s337 = ssub.s32 %s42, %s51
      %s338 = sor.u32 %s336, %s337
      %s339 = ssub.s32 %s41, %s55
      %s340 = sor.u32 %s338, %s339
      %p341 = scmp.eq.s32.totalorder %s340, 0
      %s343 = sadd.s32 %s342, 1
      %s344 = scalar_select %p341, %s342, %s343
      %p347 = pneg %p341
      %p348 = scmp.eq.s32.totalorder %s33, 1
      %p349 = por %p347, %p348
      %p350 = scmp.ne.s32.totalorder %s342, %s345
      %p351 = scmp.eq.s32.totalorder %s33, 0
      %p352 = por %p350, %p351
      %p353 = scmp.ne.s32.totalorder %s342, %s345
      %p354 = scmp.eq.s32.totalorder %s38, 1
      %p355 = por %p353, %p354
      %p356 = scmp.ne.s32.totalorder %s345, %s346
      %p357 = scmp.eq.s32.totalorder %s38, 0
      %p358 = por %p356, %p357
      %p359 = scmp.ne.s32.totalorder %s345, %s346
      %p360 = scmp.eq.s32.totalorder %s39, 1
      %p361 = por %p359, %p360
      %p363 = scmp.ne.s32.totalorder %s346, %s362
      %p364 = scmp.eq.s32.totalorder %s39, 0
      %p365 = por %p363, %p364
      %p366 = scmp.le.s32.totalorder 1, %s33
      %p367 = scmp.lt.s32.totalorder %s33, 3
      %p368 = pnand %p366, %p367
      %p369 = pneg %p368
      // Predicated region
      $region9: #{tpu_custom_call.1} parent=5 // pred_check
        _
      $region10: #{tpu_custom_call.1} parent=5 // pred_check_branch
        %371 = sbr.rel (%p368) target = $region12
      $region11: #{tpu_custom_call.1} parent=5 // pred_region
        %s372 = ssub.s32 %s33, 1
        // Predicated region
        $region13: #{tpu_custom_call.1} parent=11 // pred_check
          %p373 = pneg %p153
        $region14: #{tpu_custom_call.1} parent=11 // pred_check_branch
          %375 = sbr.rel (%p373) target = $region16
        $region15: #{tpu_custom_call.1} parent=11 // pred_region
          %s377 = ssub.s32 512, 512
          %378 = vsyncadd [#allocation12], %s377
          %s379 = sshll.u32 [#allocation11], 4
          %s380 = int_to_ptr.vmem [resolvable:$true] %s379
          %385 = dma.hbm_to_vmem [thread:$0]  %s3, 512, %s380, [#allocation12], 128, 128, 8
        $region16: #{tpu_custom_call.1} parent=11 // pred_fallthru
          _
        // Predicated region
        $region17: #{tpu_custom_call.1} parent=11 // pred_check
          %p386 = pneg %p174
        $region18: #{tpu_custom_call.1} parent=11 // pred_check_branch
          %388 = sbr.rel (%p386) target = $region20
        $region19: #{tpu_custom_call.1} parent=11 // pred_region
          _
        $region20: #{tpu_custom_call.1} parent=11 // pred_fallthru
          _
        // Predicated region
        $region21: #{tpu_custom_call.1} parent=11 // pred_check
          %p389 = pneg %p195
        $region22: #{tpu_custom_call.1} parent=11 // pred_check_branch
          %391 = sbr.rel (%p389) target = $region24
        $region23: #{tpu_custom_call.1} parent=11 // pred_region
          %s393 = ssub.s32 512, 512
          %394 = vsyncadd [#allocation12], %s393
          %s395 = sshll.u32 [#allocation13], 4
          %s396 = int_to_ptr.vmem [resolvable:$true] %s395
          %401 = dma.hbm_to_vmem [thread:$0]  %s5, 512, %s396, [#allocation12], 128, 128, 8
        $region24: #{tpu_custom_call.1} parent=11 // pred_fallthru
          _
        // Predicated region
        $region25: #{tpu_custom_call.1} parent=11 // pred_check
          %p402 = pneg %p216
        $region26: #{tpu_custom_call.1} parent=11 // pred_check_branch
          %404 = sbr.rel (%p402) target = $region28
        $region27: #{tpu_custom_call.1} parent=11 // pred_region
          _
        $region28: #{tpu_custom_call.1} parent=11 // pred_fallthru
          _
        // Predicated region
        $region29: #{tpu_custom_call.1} parent=11 // pred_check
          %p405 = pneg %p237
        $region30: #{tpu_custom_call.1} parent=11 // pred_check_branch
          %407 = sbr.rel (%p405) target = $region32
        $region31: #{tpu_custom_call.1} parent=11 // pred_region
          %s409 = ssub.s32 512, 512
          %410 = vsyncadd [#allocation15], %s409
          %s411 = sshll.u32 [#allocation14], 4
          %s412 = int_to_ptr.vmem [resolvable:$true] %s411
          %417 = dma.hbm_to_vmem [thread:$0]  %s7, 512, %s412, [#allocation15], 128, 128, 8
        $region32: #{tpu_custom_call.1} parent=11 // pred_fallthru
          _
        // Predicated region
        $region33: #{tpu_custom_call.1} parent=11 // pred_check
          %p418 = pneg %p258
        $region34: #{tpu_custom_call.1} parent=11 // pred_check_branch
          %420 = sbr.rel (%p418) target = $region36
        $region35: #{tpu_custom_call.1} parent=11 // pred_region
          %s422 = ssub.s32 16, 16
          %423 = vsyncadd [#allocation15], %s422
          %s425 = sshll.u32 [#allocation16], 4
          %s426 = int_to_ptr.vmem [resolvable:$true] %s425
          %428 = dma.hbm_to_vmem [thread:$0]  %s8, 16, %s426, [#allocation15]
        $region36: #{tpu_custom_call.1} parent=11 // pred_fallthru
          _
        // Predicated region
        $region37: #{tpu_custom_call.1} parent=11 // pred_check
          %p429 = pneg %p279
        $region38: #{tpu_custom_call.1} parent=11 // pred_check_branch
          %431 = sbr.rel (%p429) target = $region40
        $region39: #{tpu_custom_call.1} parent=11 // pred_region
          _
        $region40: #{tpu_custom_call.1} parent=11 // pred_fallthru
          _
        // Predicated region
        $region41: #{tpu_custom_call.1} parent=11 // pred_check
          %p432 = pneg %p300
        $region42: #{tpu_custom_call.1} parent=11 // pred_check_branch
          %434 = sbr.rel (%p432) target = $region44
        $region43: #{tpu_custom_call.1} parent=11 // pred_region
          _
        $region44: #{tpu_custom_call.1} parent=11 // pred_fallthru
          _
      $region12: #{tpu_custom_call.1} parent=5 // pred_fallthru
        _
      %p435 = scmp.lt.s32.totalorder %s33, 2
      // Predicated region
      $region45: #{tpu_custom_call.1} parent=5 // pred_check
        %p436 = pneg %p435
      $region46: #{tpu_custom_call.1} parent=5 // pred_check_branch
        %438 = sbr.rel (%p436) target = $region48
      $region47: #{tpu_custom_call.1} parent=5 // pred_region
        // Predicated region
        $region49: #{tpu_custom_call.1} parent=47 // pred_check
          %p439 = pneg %p74
        $region50: #{tpu_custom_call.1} parent=47 // pred_check_branch
          %441 = sbr.rel (%p439) target = $region52
        $region51: #{tpu_custom_call.1} parent=47 // pred_region
          %s442 = sand.u32 %s64, 1
          %s443 = scalar_lea.sflag [#allocation6], %s442
          %s444 = sand.u32 %s64, 1
          %s445 = smul.addr %s444, 8
          %s446 = scalar_lea.vmem [#allocation5], %s445
          %s448 = ssub.s32 128, 128
          %449 = vsyncadd %s443, %s448
          %s450 = sadd.s32 %s41, %s40
          %s451 = smul.addr %s450, 128
          %s452 = scalar_lea.hbm %s0, %s451
          %s454 = sshll.u32 %s446, 4
          %s455 = int_to_ptr.vmem [resolvable:$true] %s454
          %457 = dma.hbm_to_vmem [thread:$0]  %s452, 128, %s455, %s443
        $region52: #{tpu_custom_call.1} parent=47 // pred_fallthru
          _
        // Predicated region
        $region53: #{tpu_custom_call.1} parent=47 // pred_check
          %p458 = pneg %p100
        $region54: #{tpu_custom_call.1} parent=47 // pred_check_branch
          %460 = sbr.rel (%p458) target = $region56
        $region55: #{tpu_custom_call.1} parent=47 // pred_region
          %s461 = sand.u32 %s33, 1
          %s462 = scalar_lea.sflag [#allocation9], %s461
          %s463 = sand.u32 %s90, 1
          %s464 = smul.addr %s463, 8
          %s465 = scalar_lea.vmem [#allocation8], %s464
          %s467 = ssub.s32 128, 128
          %468 = vsyncadd %s462, %s467
          %s469 = smul.addr %s40, 128
          %s470 = scalar_lea.hbm %s1, %s469
          %s472 = sshll.u32 %s465, 4
          %s473 = int_to_ptr.vmem [resolvable:$true] %s472
          %475 = dma.hbm_to_vmem [thread:$0]  %s470, 128, %s473, %s462
        $region56: #{tpu_custom_call.1} parent=47 // pred_fallthru
          _
        // Predicated region
        $region57: #{tpu_custom_call.1} parent=47 // pred_check
          %p476 = pneg %p126
        $region58: #{tpu_custom_call.1} parent=47 // pred_check_branch
          %478 = sbr.rel (%p476) target = $region60
        $region59: #{tpu_custom_call.1} parent=47 // pred_region
          %s479 = sand.u32 %s33, 1
          %s480 = scalar_lea.sflag [#allocation9], %s479
          %s481 = sand.u32 %s116, 1
          %s482 = smul.addr %s481, 8
          %s483 = scalar_lea.vmem [#allocation10], %s482
          %s485 = ssub.s32 128, 128
          %486 = vsyncadd %s480, %s485
          %s487 = smul.addr %s40, 128
          %s488 = scalar_lea.hbm %s2, %s487
          %s490 = sshll.u32 %s483, 4
          %s491 = int_to_ptr.vmem [resolvable:$true] %s490
          %493 = dma.hbm_to_vmem [thread:$0]  %s488, 128, %s491, %s480
        $region60: #{tpu_custom_call.1} parent=47 // pred_fallthru
          _
      $region48: #{tpu_custom_call.1} parent=5 // pred_fallthru
        _
      %p494 = scmp.le.s32.totalorder 1, %s33
      %p495 = scmp.lt.s32.totalorder %s33, 3
      %p496 = pnand %p494, %p495
      %p497 = pneg %p496
      // Predicated region
      $region61: #{tpu_custom_call.1} parent=5 // pred_check
        _
      $region62: #{tpu_custom_call.1} parent=5 // pred_check_branch
        %499 = sbr.rel (%p496) target = $region64
      $region63: #{tpu_custom_call.1} parent=5 // pred_region
        %s500 = ssub.s32 %s33, 1
        %s501 = sand.u32 %s67, 1
        %s502 = scalar_lea.sflag [#allocation6], %s501
        %s503 = sand.u32 %s67, 1
        %s504 = smul.addr %s503, 8
        %s505 = scalar_lea.vmem [#allocation5], %s504
        // Predicated region
        $region65: #{tpu_custom_call.1} parent=63 // pred_check
          %p506 = pneg %p80
        $region66: #{tpu_custom_call.1} parent=63 // pred_check_branch
          %508 = sbr.rel (%p506) target = $region68
        $region67: #{tpu_custom_call.1} parent=63 // pred_region
          %509 = dma.done %s502, 128
        $region68: #{tpu_custom_call.1} parent=63 // pred_fallthru
          _
        %s510 = sand.u32 %s38, 1
        %s511 = scalar_lea.sflag [#allocation9], %s510
        %s512 = sand.u32 %s93, 1
        %s513 = smul.addr %s512, 8
        %s514 = scalar_lea.vmem [#allocation8], %s513
        // Predicated region
        $region69: #{tpu_custom_call.1} parent=63 // pred_check
          %p515 = pneg %p106
        $region70: #{tpu_custom_call.1} parent=63 // pred_check_branch
          %517 = sbr.rel (%p515) target = $region72
        $region71: #{tpu_custom_call.1} parent=63 // pred_region
          %518 = dma.done %s511, 128
        $region72: #{tpu_custom_call.1} parent=63 // pred_fallthru
          _
        %s519 = sand.u32 %s38, 1
        %s520 = scalar_lea.sflag [#allocation9], %s519
        %s521 = sand.u32 %s119, 1
        %s522 = smul.addr %s521, 8
        %s523 = scalar_lea.vmem [#allocation10], %s522
        // Predicated region
        $region73: #{tpu_custom_call.1} parent=63 // pred_check
          %p524 = pneg %p132
        $region74: #{tpu_custom_call.1} parent=63 // pred_check_branch
          %526 = sbr.rel (%p524) target = $region76
        $region75: #{tpu_custom_call.1} parent=63 // pred_region
          %527 = dma.done %s520, 128
        $region76: #{tpu_custom_call.1} parent=63 // pred_fallthru
          _
        // Predicated region
        $region77: #{tpu_custom_call.1} parent=63 // pred_check
          %p528 = pneg %p153
        $region78: #{tpu_custom_call.1} parent=63 // pred_check_branch
          %530 = sbr.rel (%p528) target = $region80
        $region79: #{tpu_custom_call.1} parent=63 // pred_region
          %531 = dma.done [#allocation12], 512
        $region80: #{tpu_custom_call.1} parent=63 // pred_fallthru
          _
        // Predicated region
        $region81: #{tpu_custom_call.1} parent=63 // pred_check
          %p532 = pneg %p195
        $region82: #{tpu_custom_call.1} parent=63 // pred_check_branch
          %534 = sbr.rel (%p532) target = $region84
        $region83: #{tpu_custom_call.1} parent=63 // pred_region
          %535 = dma.done [#allocation12], 512
        $region84: #{tpu_custom_call.1} parent=63 // pred_fallthru
          _
        // Predicated region
        $region85: #{tpu_custom_call.1} parent=63 // pred_check
          %p536 = pneg %p237
        $region86: #{tpu_custom_call.1} parent=63 // pred_check_branch
          %538 = sbr.rel (%p536) target = $region88
        $region87: #{tpu_custom_call.1} parent=63 // pred_region
          %539 = dma.done [#allocation15], 512
        $region88: #{tpu_custom_call.1} parent=63 // pred_fallthru
          _
        // Predicated region
        $region89: #{tpu_custom_call.1} parent=63 // pred_check
          %p540 = pneg %p258
        $region90: #{tpu_custom_call.1} parent=63 // pred_check_branch
          %542 = sbr.rel (%p540) target = $region92
        $region91: #{tpu_custom_call.1} parent=63 // pred_region
          %543 = dma.done [#allocation15], 16
        $region92: #{tpu_custom_call.1} parent=63 // pred_fallthru
          _
        %s544 = sand.u32 %s67, 1
        %s545 = scalar_lea.sflag [#allocation6], %s544
        %s546 = sand.u32 %s67, 1
        %s547 = smul.addr %s546, 8
        %s548 = scalar_lea.vmem [#allocation5], %s547
        %p549 = pneg %p80
        %p550 = pneg %p77
        %s551 = sand.u32 %s38, 1
        %s552 = scalar_lea.sflag [#allocation9], %s551
        %s553 = sand.u32 %s93, 1
        %s554 = smul.addr %s553, 8
        %s555 = scalar_lea.vmem [#allocation8], %s554
        %p556 = pneg %p106
        %p557 = pneg %p103
        %s558 = sand.u32 %s38, 1
        %s559 = scalar_lea.sflag [#allocation9], %s558
        %s560 = sand.u32 %s119, 1
        %s561 = smul.addr %s560, 8
        %s562 = scalar_lea.vmem [#allocation10], %s561
        %p563 = pneg %p132
        %p564 = pneg %p129
        %p565 = pneg %p153
        %p566 = pneg %p150
        %p567 = pneg %p174
        %p568 = pneg %p171
        %p569 = pneg %p195
        %p570 = pneg %p192
        %p571 = pneg %p216
        %p572 = pneg %p213
        %p573 = pneg %p237
        %p574 = pneg %p234
        %p575 = pneg %p258
        %p576 = pneg %p255
        %p577 = pneg %p279
        %p578 = pneg %p276
        %p579 = pneg %p300
        %p580 = pneg %p297
        %p581 = pneg %p328
        %p582 = pneg %p325
        %s583 = sand.u32 %s315, 1
        %s584 = scalar_lea.sflag [#allocation7], %s583
        %s585 = sand.u32 %s315, 1
        %s586 = smul.addr %s585, 8
        %s587 = scalar_lea.vmem [#allocation17], %s586
        %p588 = pneg %p358
        %p589 = pneg %p355
        %s590 = sand.u32 %s345, 1
        %s591 = scalar_lea.sflag [#allocation19], %s590
        %s592 = sand.u32 %s345, 1
        %s593 = smul.addr %s592, 32
        %s594 = scalar_lea.vmem [#allocation18], %s593
        %s595 = smul.u32 4, %s45
        %s596 = smul.u32 %s45, 32
        %s597 = scalar_lea.vmem [#allocation11], %s596
        %v598 = vld [vmem:[%s597] sm:$0xff]
        %v599 = vld [vmem:[%s597 + $0x8] sm:$0xff]
        %v600 = vld [vmem:[%s597 + $0x10] sm:$0xff]
        %v601 = vld [vmem:[%s597 + $0x18] sm:$0xff]
        %s602 = scalar_lea.vmem %s4, %s45
        %v603 = vld [vmem:[%s602] sm:$0x1]
        %s604 = scalar_lea.vmem %s9, %s596
        %v605 = vld [vmem:[%s604] sm:$0xff]
        %v606 = vld [vmem:[%s604 + $0x8] sm:$0xff]
        %v607 = vld [vmem:[%s604 + $0x10] sm:$0xff]
        %v608 = vld [vmem:[%s604 + $0x18] sm:$0xff]
        %v609 = vld [vmem:[%s505] sm:$0xff]
        %v611 = vlaneseq
        %v612 = vshrl.u32 %v611, 7
        %v613 = vsub.s32 0, %v612
        %v614 = vrot.slane %v603, %v613
        %vm616 = vcmask 261120
        %v618 = vsel %vm616, %v609, 0
        %620 = vmatprep.subr.mxu0 0.0
        %621 = vmatpush1.msra.mxu0 %v598
        %622 = vmatprep.subr.mxu0 0.0
        %623 = vmatpush1.msra.mxu0 %v599
        %624 = vmatprep.subr.mxu0 0.0
        %625 = vmatpush1.msra.mxu0 %v600
        %626 = vmatprep.subr.mxu0 0.0
        %627 = vmatpush1.msra.mxu0 %v601
        %628 = vmatprep.subr.mxu0 0.0
        %629 = vmatpush1.msra.mxu0 0.0
        %630 = vmatprep.subr.mxu0 0.0
        %631 = vmatpush1.msra.mxu0 0.0
        %632 = vmatprep.subr.mxu0 0.0
        %633 = vmatpush1.msra.mxu0 0.0
        %634 = vmatprep.subr.mxu0 0.0
        %635 = vmatpush1.msra.mxu0 0.0
        %636 = vmatprep.subr.mxu0 0.0
        %637 = vmatpush1.msra.mxu0 0.0
        %638 = vmatprep.subr.mxu0 0.0
        %639 = vmatpush1.msra.mxu0 0.0
        %640 = vmatprep.subr.mxu0 0.0
        %641 = vmatpush1.msra.mxu0 0.0
        %642 = vmatprep.subr.mxu0 0.0
        %643 = vmatpush1.msra.mxu0 0.0
        %644 = vmatprep.subr.mxu0 0.0
        %645 = vmatpush1.msra.mxu0 0.0
        %646 = vmatprep.subr.mxu0 0.0
        %647 = vmatpush1.msra.mxu0 0.0
        %648 = vmatprep.subr.mxu0 0.0
        %649 = vmatpush1.msra.mxu0 0.0
        %650 = vmatprep.subr.mxu0 0.0
        %651 = vmatpush1.msra.mxu0 0.0
        %652 = vmatprep.subr.mxu0 0.0
        %653 = vmatpush1.msra.mxu0 0.0
        %654 = vmatprep.subr.mxu0 0.0
        %655 = vmatpush1.msra.mxu0 0.0
        %656 = vmatprep.subr.mxu0 0.0
        %657 = vmatpush1.msra.mxu0 0.0
        %658 = vmatprep.subr.mxu0 0.0
        %659 = vmatpush1.msra.mxu0 0.0
        %660 = vmatprep.subr.mxu0 0.0
        %661 = vmatpush1.msra.mxu0 0.0
        %662 = vmatprep.subr.mxu0 0.0
        %663 = vmatpush1.msra.mxu0 0.0
        %664 = vmatprep.subr.mxu0 0.0
        %665 = vmatpush1.msra.mxu0 0.0
        %666 = vmatprep.subr.mxu0 0.0
        %667 = vmatpush1.msra.mxu0 0.0
        %668 = vmatprep.subr.mxu0 0.0
        %669 = vmatpush1.msra.mxu0 0.0
        %670 = vmatprep.subr.mxu0 0.0
        %671 = vmatpush1.msra.mxu0 0.0
        %672 = vmatprep.subr.mxu0 0.0
        %673 = vmatpush1.msra.mxu0 0.0
        %674 = vmatprep.subr.mxu0 0.0
        %675 = vmatpush1.msra.mxu0 0.0
        %676 = vmatprep.subr.mxu0 0.0
        %677 = vmatpush1.msra.mxu0 0.0
        %678 = vmatprep.subr.mxu0 0.0
        %679 = vmatpush1.msra.mxu0 0.0
        %680 = vmatprep.subr.mxu0 0.0
        %681 = vmatpush1.msra.mxu0 0.0
        %682 = vmatprep.subr.mxu0 0.0
        %683 = vmatpush1.msra.mxu0 0.0
        %684 = vmatprep.mubr.f32.mxu0 0.0
        %685 = vmatmul.mubr.f32.gmra.mrb[0].mxu0 %v618
        %v686 = vpop.f32.mrb[0].mxu0
        %v687 = vadd.f32 %v614, %v686
        %v688 = vpop.f32.mrb[0].mxu0
        %689 = vdwg.mxu0
        %p690 = scmp.eq.s32.totalorder %s44, 0
        // Predicated region
        $region93: #{tpu_custom_call.1} parent=63 // pred_check
          %p691 = pneg %p690
        $region94: #{tpu_custom_call.1} parent=63 // pred_check_branch
          %693 = sbr.rel (%p691) target = $region96
        $region95: #{tpu_custom_call.1} parent=63 // pred_region
          %s694 = scalar_lea.vmem [#allocation13], %s596
          %v695 = vld [vmem:[%s694] sm:$0xff]
          %v696 = vld [vmem:[%s694 + $0x8] sm:$0xff]
          %v697 = vld [vmem:[%s694 + $0x10] sm:$0xff]
          %v698 = vld [vmem:[%s694 + $0x18] sm:$0xff]
          %s699 = scalar_lea.vmem %s6, %s45
          %v700 = vld [vmem:[%s699] sm:$0x1]
          %s701 = scalar_lea.vmem [#allocation14], %s596
          %v702 = vld [vmem:[%s701] sm:$0xff]
          %v703 = vld [vmem:[%s701 + $0x8] sm:$0xff]
          %v704 = vld [vmem:[%s701 + $0x10] sm:$0xff]
          %v705 = vld [vmem:[%s701 + $0x18] sm:$0xff]
          %s706 = scalar_lea.vmem [#allocation16], %s45
          %v707 = vld [vmem:[%s706] sm:$0x1]
          %v708 = vld [vmem:[%s514] sm:$0xff]
          %v710 = vlaneseq
          %v711 = vshrl.u32 %v710, 7
          %v712 = vsub.s32 0, %v711
          %v713 = vrot.slane %v700, %v712
          %v716 = vsel %vm616, %v708, 0
          %718 = vmatprep.subr.mxu0 0.0
          %719 = vmatpush1.msra.mxu0 %v695
          %720 = vmatprep.subr.mxu0 0.0
          %721 = vmatpush1.msra.mxu0 %v696
          %722 = vmatprep.subr.mxu0 0.0
          %723 = vmatpush1.msra.mxu0 %v697
          %724 = vmatprep.subr.mxu0 0.0
          %725 = vmatpush1.msra.mxu0 %v698
          %726 = vmatprep.subr.mxu0 0.0
          %727 = vmatpush1.msra.mxu0 0.0
          %728 = vmatprep.subr.mxu0 0.0
          %729 = vmatpush1.msra.mxu0 0.0
          %730 = vmatprep.subr.mxu0 0.0
          %731 = vmatpush1.msra.mxu0 0.0
          %732 = vmatprep.subr.mxu0 0.0
          %733 = vmatpush1.msra.mxu0 0.0
          %734 = vmatprep.subr.mxu0 0.0
          %735 = vmatpush1.msra.mxu0 0.0
          %736 = vmatprep.subr.mxu0 0.0
          %737 = vmatpush1.msra.mxu0 0.0
          %738 = vmatprep.subr.mxu0 0.0
          %739 = vmatpush1.msra.mxu0 0.0
          %740 = vmatprep.subr.mxu0 0.0
          %741 = vmatpush1.msra.mxu0 0.0
          %742 = vmatprep.subr.mxu0 0.0
          %743 = vmatpush1.msra.mxu0 0.0
          %744 = vmatprep.subr.mxu0 0.0
          %745 = vmatpush1.msra.mxu0 0.0
          %746 = vmatprep.subr.mxu0 0.0
          %747 = vmatpush1.msra.mxu0 0.0
          %748 = vmatprep.subr.mxu0 0.0
          %749 = vmatpush1.msra.mxu0 0.0
          %750 = vmatprep.subr.mxu0 0.0
          %751 = vmatpush1.msra.mxu0 0.0
          %752 = vmatprep.subr.mxu0 0.0
          %753 = vmatpush1.msra.mxu0 0.0
          %754 = vmatprep.subr.mxu0 0.0
          %755 = vmatpush1.msra.mxu0 0.0
          %756 = vmatprep.subr.mxu0 0.0
          %757 = vmatpush1.msra.mxu0 0.0
          %758 = vmatprep.subr.mxu0 0.0
          %759 = vmatpush1.msra.mxu0 0.0
          %760 = vmatprep.subr.mxu0 0.0
          %761 = vmatpush1.msra.mxu0 0.0
          %762 = vmatprep.subr.mxu0 0.0
          %763 = vmatpush1.msra.mxu0 0.0
          %764 = vmatprep.subr.mxu0 0.0
          %765 = vmatpush1.msra.mxu0 0.0
          %766 = vmatprep.subr.mxu0 0.0
          %767 = vmatpush1.msra.mxu0 0.0
          %768 = vmatprep.subr.mxu0 0.0
          %769 = vmatpush1.msra.mxu0 0.0
          %770 = vmatprep.subr.mxu0 0.0
          %771 = vmatpush1.msra.mxu0 0.0
          %772 = vmatprep.subr.mxu0 0.0
          %773 = vmatpush1.msra.mxu0 0.0
          %774 = vmatprep.subr.mxu0 0.0
          %775 = vmatpush1.msra.mxu0 0.0
          %776 = vmatprep.subr.mxu0 0.0
          %777 = vmatpush1.msra.mxu0 0.0
          %778 = vmatprep.subr.mxu0 0.0
          %779 = vmatpush1.msra.mxu0 0.0
          %780 = vmatprep.subr.mxu0 0.0
          %781 = vmatpush1.msra.mxu0 0.0
          %782 = vmatprep.mubr.f32.mxu0 0.0
          %783 = vmatmul.mubr.f32.gmra.mrb[0].mxu0 %v716
          %v784 = vpop.f32.mrb[0].mxu0
          %v785 = vadd.f32 %v713, %v784
          %v786 = vpop.f32.mrb[0].mxu0
          %787 = vdwg.mxu0
          %v788 = vld [vmem:[%s523] sm:$0xff]
          %v790 = vlaneseq
          %v791 = vshrl.u32 %v790, 7
          %v792 = vsub.s32 0, %v791
          %v793 = vrot.slane %v707, %v792
          %v796 = vsel %vm616, %v788, 0
          %798 = vmatprep.subr.mxu0 0.0
          %799 = vmatpush1.msra.mxu0 %v702
          %800 = vmatprep.subr.mxu0 0.0
          %801 = vmatpush1.msra.mxu0 %v703
          %802 = vmatprep.subr.mxu0 0.0
          %803 = vmatpush1.msra.mxu0 %v704
          %804 = vmatprep.subr.mxu0 0.0
          %805 = vmatpush1.msra.mxu0 %v705
          %806 = vmatprep.subr.mxu0 0.0
          %807 = vmatpush1.msra.mxu0 0.0
          %808 = vmatprep.subr.mxu0 0.0
          %809 = vmatpush1.msra.mxu0 0.0
          %810 = vmatprep.subr.mxu0 0.0
          %811 = vmatpush1.msra.mxu0 0.0
          %812 = vmatprep.subr.mxu0 0.0
          %813 = vmatpush1.msra.mxu0 0.0
          %814 = vmatprep.subr.mxu0 0.0
          %815 = vmatpush1.msra.mxu0 0.0
          %816 = vmatprep.subr.mxu0 0.0
          %817 = vmatpush1.msra.mxu0 0.0
          %818 = vmatprep.subr.mxu0 0.0
          %819 = vmatpush1.msra.mxu0 0.0
          %820 = vmatprep.subr.mxu0 0.0
          %821 = vmatpush1.msra.mxu0 0.0
          %822 = vmatprep.subr.mxu0 0.0
          %823 = vmatpush1.msra.mxu0 0.0
          %824 = vmatprep.subr.mxu0 0.0
          %825 = vmatpush1.msra.mxu0 0.0
          %826 = vmatprep.subr.mxu0 0.0
          %827 = vmatpush1.msra.mxu0 0.0
          %828 = vmatprep.subr.mxu0 0.0
          %829 = vmatpush1.msra.mxu0 0.0
          %830 = vmatprep.subr.mxu0 0.0
          %831 = vmatpush1.msra.mxu0 0.0
          %832 = vmatprep.subr.mxu0 0.0
          %833 = vmatpush1.msra.mxu0 0.0
          %834 = vmatprep.subr.mxu0 0.0
          %835 = vmatpush1.msra.mxu0 0.0
          %836 = vmatprep.subr.mxu0 0.0
          %837 = vmatpush1.msra.mxu0 0.0
          %838 = vmatprep.subr.mxu0 0.0
          %839 = vmatpush1.msra.mxu0 0.0
          %840 = vmatprep.subr.mxu0 0.0
          %841 = vmatpush1.msra.mxu0 0.0
          %842 = vmatprep.subr.mxu0 0.0
          %843 = vmatpush1.msra.mxu0 0.0
          %844 = vmatprep.subr.mxu0 0.0
          %845 = vmatpush1.msra.mxu0 0.0
          %846 = vmatprep.subr.mxu0 0.0
          %847 = vmatpush1.msra.mxu0 0.0
          %848 = vmatprep.subr.mxu0 0.0
          %849 = vmatpush1.msra.mxu0 0.0
          %850 = vmatprep.subr.mxu0 0.0
          %851 = vmatpush1.msra.mxu0 0.0
          %852 = vmatprep.subr.mxu0 0.0
          %853 = vmatpush1.msra.mxu0 0.0
          %854 = vmatprep.subr.mxu0 0.0
          %855 = vmatpush1.msra.mxu0 0.0
          %856 = vmatprep.subr.mxu0 0.0
          %857 = vmatpush1.msra.mxu0 0.0
          %858 = vmatprep.subr.mxu0 0.0
          %859 = vmatpush1.msra.mxu0 0.0
          %860 = vmatprep.subr.mxu0 0.0
          %861 = vmatpush1.msra.mxu0 0.0
          %862 = vmatprep.mubr.f32.mxu0 0.0
          %863 = vmatmul.mubr.f32.gmra.mrb[0].mxu0 %v796
          %v864 = vpop.f32.mrb[0].mxu0
          %v865 = vadd.f32 %v793, %v864
          %v866 = vpop.f32.mrb[0].mxu0
          %867 = vdwg.mxu0
          %s868 = smul.u32 %s45, 8
          %s869 = scalar_lea.vmem [#allocation3], %s868
          %870 = vst.msk [vmem:[%s869] sm:$0xff] %vm616, %v785
          %s871 = scalar_lea.vmem [#allocation4], %s868
          %872 = vst.msk [vmem:[%s871] sm:$0xff] %vm616, %v865
        $region96: #{tpu_custom_call.1} parent=63 // pred_fallthru
          _
        %s873 = smul.u32 %s45, 8
        %s874 = scalar_lea.vmem [#allocation3], %s873
        %v875 = vld [vmem:[%s874] sm:$0xff]
        %s876 = scalar_lea.vmem [#allocation4], %s873
        %v877 = vld [vmem:[%s876] sm:$0xff]
        %vm878 = vcmask 64512
        %v880 = vsel %vm878, %v687, 0
        %v883 = vsel %vm878, %v875, 0
        %885 = vmatprep.subr.mxu0 0.0
        %886 = vmatpush1.xpose.msra.mxu0 %v883
        %887 = vmatprep.subr.mxu0 0.0
        %888 = vmatpush1.xpose.msra.mxu0 0.0
        %889 = vmatprep.subr.mxu0 0.0
        %890 = vmatpush1.xpose.msra.mxu0 0.0
        %891 = vmatprep.subr.mxu0 0.0
        %892 = vmatpush1.xpose.msra.mxu0 0.0
        %893 = vmatprep.subr.mxu0 0.0
        %894 = vmatpush1.xpose.msra.mxu0 0.0
        %895 = vmatprep.subr.mxu0 0.0
        %896 = vmatpush1.xpose.msra.mxu0 0.0
        %897 = vmatprep.subr.mxu0 0.0
        %898 = vmatpush1.xpose.msra.mxu0 0.0
        %899 = vmatprep.subr.mxu0 0.0
        %900 = vmatpush1.xpose.msra.mxu0 0.0
        %901 = vmatprep.subr.mxu0 0.0
        %902 = vmatpush1.xpose.msra.mxu0 0.0
        %903 = vmatprep.subr.mxu0 0.0
        %904 = vmatpush1.xpose.msra.mxu0 0.0
        %905 = vmatprep.subr.mxu0 0.0
        %906 = vmatpush1.xpose.msra.mxu0 0.0
        %907 = vmatprep.subr.mxu0 0.0
        %908 = vmatpush1.xpose.msra.mxu0 0.0
        %909 = vmatprep.subr.mxu0 0.0
        %910 = vmatpush1.xpose.msra.mxu0 0.0
        %911 = vmatprep.subr.mxu0 0.0
        %912 = vmatpush1.xpose.msra.mxu0 0.0
        %913 = vmatprep.subr.mxu0 0.0
        %914 = vmatpush1.xpose.msra.mxu0 0.0
        %915 = vmatprep.subr.mxu0 0.0
        %916 = vmatpush1.xpose.msra.mxu0 0.0
        %917 = vmatprep.subr.mxu0 0.0
        %918 = vmatpush1.xpose.msra.mxu0 0.0
        %919 = vmatprep.subr.mxu0 0.0
        %920 = vmatpush1.xpose.msra.mxu0 0.0
        %921 = vmatprep.subr.mxu0 0.0
        %922 = vmatpush1.xpose.msra.mxu0 0.0
        %923 = vmatprep.subr.mxu0 0.0
        %924 = vmatpush1.xpose.msra.mxu0 0.0
        %925 = vmatprep.subr.mxu0 0.0
        %926 = vmatpush1.xpose.msra.mxu0 0.0
        %927 = vmatprep.subr.mxu0 0.0
        %928 = vmatpush1.xpose.msra.mxu0 0.0
        %929 = vmatprep.subr.mxu0 0.0
        %930 = vmatpush1.xpose.msra.mxu0 0.0
        %931 = vmatprep.subr.mxu0 0.0
        %932 = vmatpush1.xpose.msra.mxu0 0.0
        %933 = vmatprep.subr.mxu0 0.0
        %934 = vmatpush1.xpose.msra.mxu0 0.0
        %935 = vmatprep.subr.mxu0 0.0
        %936 = vmatpush1.xpose.msra.mxu0 0.0
        %937 = vmatprep.subr.mxu0 0.0
        %938 = vmatpush1.xpose.msra.mxu0 0.0
        %939 = vmatprep.subr.mxu0 0.0
        %940 = vmatpush1.xpose.msra.mxu0 0.0
        %941 = vmatprep.subr.mxu0 0.0
        %942 = vmatpush1.xpose.msra.mxu0 0.0
        %943 = vmatprep.subr.mxu0 0.0
        %944 = vmatpush1.xpose.msra.mxu0 0.0
        %945 = vmatprep.subr.mxu0 0.0
        %946 = vmatpush1.xpose.msra.mxu0 0.0
        %947 = vmatprep.subr.mxu0 0.0
        %948 = vmatpush1.xpose.msra.mxu0 0.0
        %949 = vmatprep.mubr.f32.mxu0 0.0
        %950 = vmatmul.mubr.f32.gmra.mrb[0].mxu0 %v880
        %v951 = vpop.f32.mrb[0].mxu0
        %v952 = vadd.f32 0.0, %v951
        %v953 = vpop.f32.mrb[0].mxu0
        %954 = vdwg.mxu0
        %v955 = vsel %vm878, %v952, -inf
        %956 = vmax.xlane.f32.xlu0 %v955
        %v957 = vpop.xlane.xlu0 %956
        %v958 = vsub.f32 %v952, %v957
        %v959 = vmul.f32 %v958, 1.442695
        %v960 = vpow.pop %v959
        %v961 = vsel %vm878, %v960, 0.0
        %962 = vadd.xlane.f32.xlu0 %v961
        %v963 = vpop.xlane.xlu0 %962
        %v964 = vrcp.pop %v963
        %v965 = vmul.f32 %v960, %v964
        %966 = vst.msk [vmem:[%s594] sm:$0xff] %vm878, %v965
        %v968 = vsel %vm878, %v965, 0
        %970 = vmatprep.subr.mxu0 0.0
        %971 = vmatpush1.msra.mxu0 %v877
        %972 = vmatprep.subr.mxu0 0.0
        %973 = vmatpush1.msra.mxu0 0.0
        %974 = vmatprep.subr.mxu0 0.0
        %975 = vmatpush1.msra.mxu0 0.0
        %976 = vmatprep.subr.mxu0 0.0
        %977 = vmatpush1.msra.mxu0 0.0
        %978 = vmatprep.subr.mxu0 0.0
        %979 = vmatpush1.msra.mxu0 0.0
        %980 = vmatprep.subr.mxu0 0.0
        %981 = vmatpush1.msra.mxu0 0.0
        %982 = vmatprep.subr.mxu0 0.0
        %983 = vmatpush1.msra.mxu0 0.0
        %984 = vmatprep.subr.mxu0 0.0
        %985 = vmatpush1.msra.mxu0 0.0
        %986 = vmatprep.subr.mxu0 0.0
        %987 = vmatpush1.msra.mxu0 0.0
        %988 = vmatprep.subr.mxu0 0.0
        %989 = vmatpush1.msra.mxu0 0.0
        %990 = vmatprep.subr.mxu0 0.0
        %991 = vmatpush1.msra.mxu0 0.0
        %992 = vmatprep.subr.mxu0 0.0
        %993 = vmatpush1.msra.mxu0 0.0
        %994 = vmatprep.subr.mxu0 0.0
        %995 = vmatpush1.msra.mxu0 0.0
        %996 = vmatprep.subr.mxu0 0.0
        %997 = vmatpush1.msra.mxu0 0.0
        %998 = vmatprep.subr.mxu0 0.0
        %999 = vmatpush1.msra.mxu0 0.0
        %1000 = vmatprep.subr.mxu0 0.0
        %1001 = vmatpush1.msra.mxu0 0.0
        %1002 = vmatprep.subr.mxu0 0.0
        %1003 = vmatpush1.msra.mxu0 0.0
        %1004 = vmatprep.subr.mxu0 0.0
        %1005 = vmatpush1.msra.mxu0 0.0
        %1006 = vmatprep.subr.mxu0 0.0
        %1007 = vmatpush1.msra.mxu0 0.0
        %1008 = vmatprep.subr.mxu0 0.0
        %1009 = vmatpush1.msra.mxu0 0.0
        %1010 = vmatprep.subr.mxu0 0.0
        %1011 = vmatpush1.msra.mxu0 0.0
        %1012 = vmatprep.subr.mxu0 0.0
        %1013 = vmatpush1.msra.mxu0 0.0
        %1014 = vmatprep.subr.mxu0 0.0
        %1015 = vmatpush1.msra.mxu0 0.0
        %1016 = vmatprep.subr.mxu0 0.0
        %1017 = vmatpush1.msra.mxu0 0.0
        %1018 = vmatprep.subr.mxu0 0.0
        %1019 = vmatpush1.msra.mxu0 0.0
        %1020 = vmatprep.subr.mxu0 0.0
        %1021 = vmatpush1.msra.mxu0 0.0
        %1022 = vmatprep.subr.mxu0 0.0
        %1023 = vmatpush1.msra.mxu0 0.0
        %1024 = vmatprep.subr.mxu0 0.0
        %1025 = vmatpush1.msra.mxu0 0.0
        %1026 = vmatprep.subr.mxu0 0.0
        %1027 = vmatpush1.msra.mxu0 0.0
        %1028 = vmatprep.subr.mxu0 0.0
        %1029 = vmatpush1.msra.mxu0 0.0
        %1030 = vmatprep.subr.mxu0 0.0
        %1031 = vmatpush1.msra.mxu0 0.0
        %1032 = vmatprep.subr.mxu0 0.0
        %1033 = vmatpush1.msra.mxu0 0.0
        %1034 = vmatprep.mubr.f32.mxu0 0.0
        %1035 = vmatmul.mubr.f32.gmra.mrb[0].mxu0 %v968
        %v1036 = vpop.f32.mrb[0].mxu0
        %v1037 = vadd.f32 0.0, %v1036
        %v1038 = vpop.f32.mrb[0].mxu0
        %1039 = vdwg.mxu0
        %1040 = vrot.lane.b32.xlu0 %v687, 120
        %v1041 = vpop.permute.xlu0 %1040
        %1042 = vrot.lane.b32.xlu0 %v875, 120
        %v1043 = vpop.permute.xlu0 %1042
        %v1044 = vsel %vm878, %v1041, 0
        %v1046 = vsel %vm878, %v1043, 0
        %1048 = vmatprep.subr.mxu0 0.0
        %1049 = vmatpush1.xpose.msra.mxu0 %v1046
        %1050 = vmatprep.subr.mxu0 0.0
        %1051 = vmatpush1.xpose.msra.mxu0 0.0
        %1052 = vmatprep.subr.mxu0 0.0
        %1053 = vmatpush1.xpose.msra.mxu0 0.0
        %1054 = vmatprep.subr.mxu0 0.0
        %1055 = vmatpush1.xpose.msra.mxu0 0.0
        %1056 = vmatprep.subr.mxu0 0.0
        %1057 = vmatpush1.xpose.msra.mxu0 0.0
        %1058 = vmatprep.subr.mxu0 0.0
        %1059 = vmatpush1.xpose.msra.mxu0 0.0
        %1060 = vmatprep.subr.mxu0 0.0
        %1061 = vmatpush1.xpose.msra.mxu0 0.0
        %1062 = vmatprep.subr.mxu0 0.0
        %1063 = vmatpush1.xpose.msra.mxu0 0.0
        %1064 = vmatprep.subr.mxu0 0.0
        %1065 = vmatpush1.xpose.msra.mxu0 0.0
        %1066 = vmatprep.subr.mxu0 0.0
        %1067 = vmatpush1.xpose.msra.mxu0 0.0
        %1068 = vmatprep.subr.mxu0 0.0
        %1069 = vmatpush1.xpose.msra.mxu0 0.0
        %1070 = vmatprep.subr.mxu0 0.0
        %1071 = vmatpush1.xpose.msra.mxu0 0.0
        %1072 = vmatprep.subr.mxu0 0.0
        %1073 = vmatpush1.xpose.msra.mxu0 0.0
        %1074 = vmatprep.subr.mxu0 0.0
        %1075 = vmatpush1.xpose.msra.mxu0 0.0
        %1076 = vmatprep.subr.mxu0 0.0
        %1077 = vmatpush1.xpose.msra.mxu0 0.0
        %1078 = vmatprep.subr.mxu0 0.0
        %1079 = vmatpush1.xpose.msra.mxu0 0.0
        %1080 = vmatprep.subr.mxu0 0.0
        %1081 = vmatpush1.xpose.msra.mxu0 0.0
        %1082 = vmatprep.subr.mxu0 0.0
        %1083 = vmatpush1.xpose.msra.mxu0 0.0
        %1084 = vmatprep.subr.mxu0 0.0
        %1085 = vmatpush1.xpose.msra.mxu0 0.0
        %1086 = vmatprep.subr.mxu0 0.0
        %1087 = vmatpush1.xpose.msra.mxu0 0.0
        %1088 = vmatprep.subr.mxu0 0.0
        %1089 = vmatpush1.xpose.msra.mxu0 0.0
        %1090 = vmatprep.subr.mxu0 0.0
        %1091 = vmatpush1.xpose.msra.mxu0 0.0
        %1092 = vmatprep.subr.mxu0 0.0
        %1093 = vmatpush1.xpose.msra.mxu0 0.0
        %1094 = vmatprep.subr.mxu0 0.0
        %1095 = vmatpush1.xpose.msra.mxu0 0.0
        %1096 = vmatprep.subr.mxu0 0.0
        %1097 = vmatpush1.xpose.msra.mxu0 0.0
        %1098 = vmatprep.subr.mxu0 0.0
        %1099 = vmatpush1.xpose.msra.mxu0 0.0
        %1100 = vmatprep.subr.mxu0 0.0
        %1101 = vmatpush1.xpose.msra.mxu0 0.0
        %1102 = vmatprep.subr.mxu0 0.0
        %1103 = vmatpush1.xpose.msra.mxu0 0.0
        %1104 = vmatprep.subr.mxu0 0.0
        %1105 = vmatpush1.xpose.msra.mxu0 0.0
        %1106 = vmatprep.subr.mxu0 0.0
        %1107 = vmatpush1.xpose.msra.mxu0 0.0
        %1108 = vmatprep.subr.mxu0 0.0
        %1109 = vmatpush1.xpose.msra.mxu0 0.0
        %1110 = vmatprep.subr.mxu0 0.0
        %1111 = vmatpush1.xpose.msra.mxu0 0.0
        %1112 = vmatprep.mubr.f32.mxu0 0.0
        %1113 = vmatmul.mubr.f32.gmra.mrb[0].mxu0 %v1044
        %v1114 = vpop.f32.mrb[0].mxu0
        %v1115 = vadd.f32 0.0, %v1114
        %v1116 = vpop.f32.mrb[0].mxu0
        %1117 = vdwg.mxu0
        %v1118 = vsel %vm878, %v1115, -inf
        %1119 = vmax.xlane.f32.xlu0 %v1118
        %v1120 = vpop.xlane.xlu0 %1119
        %v1121 = vsub.f32 %v1115, %v1120
        %v1122 = vmul.f32 %v1121, 1.442695
        %v1123 = vpow.pop %v1122
        %v1124 = vsel %vm878, %v1123, 0.0
        %1125 = vadd.xlane.f32.xlu0 %v1124
        %v1126 = vpop.xlane.xlu0 %1125
        %v1127 = vrcp.pop %v1126
        %v1128 = vmul.f32 %v1123, %v1127
        %s1129 = scalar_lea.vmem %s594, 8 [#allocation18]
        %1130 = vst.msk [vmem:[%s1129] sm:$0xff] %vm878, %v1128
        %1132 = vrot.lane.b32.xlu0 %v877, 120
        %v1133 = vpop.permute.xlu0 %1132
        %v1136 = vsel %vm878, %v1128, 0
        %1138 = vmatprep.subr.mxu0 0.0
        %1139 = vmatpush1.msra.mxu0 %v1133
        %1140 = vmatprep.subr.mxu0 0.0
        %1141 = vmatpush1.msra.mxu0 0.0
        %1142 = vmatprep.subr.mxu0 0.0
        %1143 = vmatpush1.msra.mxu0 0.0
        %1144 = vmatprep.subr.mxu0 0.0
        %1145 = vmatpush1.msra.mxu0 0.0
        %1146 = vmatprep.subr.mxu0 0.0
        %1147 = vmatpush1.msra.mxu0 0.0
        %1148 = vmatprep.subr.mxu0 0.0
        %1149 = vmatpush1.msra.mxu0 0.0
        %1150 = vmatprep.subr.mxu0 0.0
        %1151 = vmatpush1.msra.mxu0 0.0
        %1152 = vmatprep.subr.mxu0 0.0
        %1153 = vmatpush1.msra.mxu0 0.0
        %1154 = vmatprep.subr.mxu0 0.0
        %1155 = vmatpush1.msra.mxu0 0.0
        %1156 = vmatprep.subr.mxu0 0.0
        %1157 = vmatpush1.msra.mxu0 0.0
        %1158 = vmatprep.subr.mxu0 0.0
        %1159 = vmatpush1.msra.mxu0 0.0
        %1160 = vmatprep.subr.mxu0 0.0
        %1161 = vmatpush1.msra.mxu0 0.0
        %1162 = vmatprep.subr.mxu0 0.0
        %1163 = vmatpush1.msra.mxu0 0.0
        %1164 = vmatprep.subr.mxu0 0.0
        %1165 = vmatpush1.msra.mxu0 0.0
        %1166 = vmatprep.subr.mxu0 0.0
        %1167 = vmatpush1.msra.mxu0 0.0
        %1168 = vmatprep.subr.mxu0 0.0
        %1169 = vmatpush1.msra.mxu0 0.0
        %1170 = vmatprep.subr.mxu0 0.0
        %1171 = vmatpush1.msra.mxu0 0.0
        %1172 = vmatprep.subr.mxu0 0.0
        %1173 = vmatpush1.msra.mxu0 0.0
        %1174 = vmatprep.subr.mxu0 0.0
        %1175 = vmatpush1.msra.mxu0 0.0
        %1176 = vmatprep.subr.mxu0 0.0
        %1177 = vmatpush1.msra.mxu0 0.0
        %1178 = vmatprep.subr.mxu0 0.0
        %1179 = vmatpush1.msra.mxu0 0.0
        %1180 = vmatprep.subr.mxu0 0.0
        %1181 = vmatpush1.msra.mxu0 0.0
        %1182 = vmatprep.subr.mxu0 0.0
        %1183 = vmatpush1.msra.mxu0 0.0
        %1184 = vmatprep.subr.mxu0 0.0
        %1185 = vmatpush1.msra.mxu0 0.0
        %1186 = vmatprep.subr.mxu0 0.0
        %1187 = vmatpush1.msra.mxu0 0.0
        %1188 = vmatprep.subr.mxu0 0.0
        %1189 = vmatpush1.msra.mxu0 0.0
        %1190 = vmatprep.subr.mxu0 0.0
        %1191 = vmatpush1.msra.mxu0 0.0
        %1192 = vmatprep.subr.mxu0 0.0
        %1193 = vmatpush1.msra.mxu0 0.0
        %1194 = vmatprep.subr.mxu0 0.0
        %1195 = vmatpush1.msra.mxu0 0.0
        %1196 = vmatprep.subr.mxu0 0.0
        %1197 = vmatpush1.msra.mxu0 0.0
        %1198 = vmatprep.subr.mxu0 0.0
        %1199 = vmatpush1.msra.mxu0 0.0
        %1200 = vmatprep.subr.mxu0 0.0
        %1201 = vmatpush1.msra.mxu0 0.0
        %1202 = vmatprep.mubr.f32.mxu0 0.0
        %1203 = vmatmul.mubr.f32.gmra.mrb[0].mxu0 %v1136
        %v1204 = vpop.f32.mrb[0].mxu0
        %v1205 = vadd.f32 0.0, %v1204
        %v1206 = vpop.f32.mrb[0].mxu0
        %1207 = vdwg.mxu0
        %1208 = vrot.lane.b32.xlu0 %v687, 112
        %v1209 = vpop.permute.xlu0 %1208
        %1210 = vrot.lane.b32.xlu0 %v875, 112
        %v1211 = vpop.permute.xlu0 %1210
        %v1212 = vsel %vm878, %v1209, 0
        %v1214 = vsel %vm878, %v1211, 0
        %1216 = vmatprep.subr.mxu0 0.0
        %1217 = vmatpush1.xpose.msra.mxu0 %v1214
        %1218 = vmatprep.subr.mxu0 0.0
        %1219 = vmatpush1.xpose.msra.mxu0 0.0
        %1220 = vmatprep.subr.mxu0 0.0
        %1221 = vmatpush1.xpose.msra.mxu0 0.0
        %1222 = vmatprep.subr.mxu0 0.0
        %1223 = vmatpush1.xpose.msra.mxu0 0.0
        %1224 = vmatprep.subr.mxu0 0.0
        %1225 = vmatpush1.xpose.msra.mxu0 0.0
        %1226 = vmatprep.subr.mxu0 0.0
        %1227 = vmatpush1.xpose.msra.mxu0 0.0
        %1228 = vmatprep.subr.mxu0 0.0
        %1229 = vmatpush1.xpose.msra.mxu0 0.0
        %1230 = vmatprep.subr.mxu0 0.0
        %1231 = vmatpush1.xpose.msra.mxu0 0.0
        %1232 = vmatprep.subr.mxu0 0.0
        %1233 = vmatpush1.xpose.msra.mxu0 0.0
        %1234 = vmatprep.subr.mxu0 0.0
        %1235 = vmatpush1.xpose.msra.mxu0 0.0
        %1236 = vmatprep.subr.mxu0 0.0
        %1237 = vmatpush1.xpose.msra.mxu0 0.0
        %1238 = vmatprep.subr.mxu0 0.0
        %1239 = vmatpush1.xpose.msra.mxu0 0.0
        %1240 = vmatprep.subr.mxu0 0.0
        %1241 = vmatpush1.xpose.msra.mxu0 0.0
        %1242 = vmatprep.subr.mxu0 0.0
        %1243 = vmatpush1.xpose.msra.mxu0 0.0
        %1244 = vmatprep.subr.mxu0 0.0
        %1245 = vmatpush1.xpose.msra.mxu0 0.0
        %1246 = vmatprep.subr.mxu0 0.0
        %1247 = vmatpush1.xpose.msra.mxu0 0.0
        %1248 = vmatprep.subr.mxu0 0.0
        %1249 = vmatpush1.xpose.msra.mxu0 0.0
        %1250 = vmatprep.subr.mxu0 0.0
        %1251 = vmatpush1.xpose.msra.mxu0 0.0
        %1252 = vmatprep.subr.mxu0 0.0
        %1253 = vmatpush1.xpose.msra.mxu0 0.0
        %1254 = vmatprep.subr.mxu0 0.0
        %1255 = vmatpush1.xpose.msra.mxu0 0.0
        %1256 = vmatprep.subr.mxu0 0.0
        %1257 = vmatpush1.xpose.msra.mxu0 0.0
        %1258 = vmatprep.subr.mxu0 0.0
        %1259 = vmatpush1.xpose.msra.mxu0 0.0
        %1260 = vmatprep.subr.mxu0 0.0
        %1261 = vmatpush1.xpose.msra.mxu0 0.0
        %1262 = vmatprep.subr.mxu0 0.0
        %1263 = vmatpush1.xpose.msra.mxu0 0.0
        %1264 = vmatprep.subr.mxu0 0.0
        %1265 = vmatpush1.xpose.msra.mxu0 0.0
        %1266 = vmatprep.subr.mxu0 0.0
        %1267 = vmatpush1.xpose.msra.mxu0 0.0
        %1268 = vmatprep.subr.mxu0 0.0
        %1269 = vmatpush1.xpose.msra.mxu0 0.0
        %1270 = vmatprep.subr.mxu0 0.0
        %1271 = vmatpush1.xpose.msra.mxu0 0.0
        %1272 = vmatprep.subr.mxu0 0.0
        %1273 = vmatpush1.xpose.msra.mxu0 0.0
        %1274 = vmatprep.subr.mxu0 0.0
        %1275 = vmatpush1.xpose.msra.mxu0 0.0
        %1276 = vmatprep.subr.mxu0 0.0
        %1277 = vmatpush1.xpose.msra.mxu0 0.0
        %1278 = vmatprep.subr.mxu0 0.0
        %1279 = vmatpush1.xpose.msra.mxu0 0.0
        %1280 = vmatprep.mubr.f32.mxu0 0.0
        %1281 = vmatmul.mubr.f32.gmra.mrb[0].mxu0 %v1212
        %v1282 = vpop.f32.mrb[0].mxu0
        %v1283 = vadd.f32 0.0, %v1282
        %v1284 = vpop.f32.mrb[0].mxu0
        %1285 = vdwg.mxu0
        %v1286 = vsel %vm878, %v1283, -inf
        %1287 = vmax.xlane.f32.xlu0 %v1286
        %v1288 = vpop.xlane.xlu0 %1287
        %v1289 = vsub.f32 %v1283, %v1288
        %v1290 = vmul.f32 %v1289, 1.442695
        %v1291 = vpow.pop %v1290
        %v1292 = vsel %vm878, %v1291, 0.0
        %1293 = vadd.xlane.f32.xlu0 %v1292
        %v1294 = vpop.xlane.xlu0 %1293
        %v1295 = vrcp.pop %v1294
        %v1296 = vmul.f32 %v1291, %v1295
        %s1297 = scalar_lea.vmem %s594, 16 [#allocation18]
        %1298 = vst.msk [vmem:[%s1297] sm:$0xff] %vm878, %v1296
        %1299 = vrot.lane.b32.xlu0 %v877, 112
        %v1300 = vpop.permute.xlu0 %1299
        %v1303 = vsel %vm878, %v1296, 0
        %1305 = vmatprep.subr.mxu0 0.0
        %1306 = vmatpush1.msra.mxu0 %v1300
        %1307 = vmatprep.subr.mxu0 0.0
        %1308 = vmatpush1.msra.mxu0 0.0
        %1309 = vmatprep.subr.mxu0 0.0
        %1310 = vmatpush1.msra.mxu0 0.0
        %1311 = vmatprep.subr.mxu0 0.0
        %1312 = vmatpush1.msra.mxu0 0.0
        %1313 = vmatprep.subr.mxu0 0.0
        %1314 = vmatpush1.msra.mxu0 0.0
        %1315 = vmatprep.subr.mxu0 0.0
        %1316 = vmatpush1.msra.mxu0 0.0
        %1317 = vmatprep.subr.mxu0 0.0
        %1318 = vmatpush1.msra.mxu0 0.0
        %1319 = vmatprep.subr.mxu0 0.0
        %1320 = vmatpush1.msra.mxu0 0.0
        %1321 = vmatprep.subr.mxu0 0.0
        %1322 = vmatpush1.msra.mxu0 0.0
        %1323 = vmatprep.subr.mxu0 0.0
        %1324 = vmatpush1.msra.mxu0 0.0
        %1325 = vmatprep.subr.mxu0 0.0
        %1326 = vmatpush1.msra.mxu0 0.0
        %1327 = vmatprep.subr.mxu0 0.0
        %1328 = vmatpush1.msra.mxu0 0.0
        %1329 = vmatprep.subr.mxu0 0.0
        %1330 = vmatpush1.msra.mxu0 0.0
        %1331 = vmatprep.subr.mxu0 0.0
        %1332 = vmatpush1.msra.mxu0 0.0
        %1333 = vmatprep.subr.mxu0 0.0
        %1334 = vmatpush1.msra.mxu0 0.0
        %1335 = vmatprep.subr.mxu0 0.0
        %1336 = vmatpush1.msra.mxu0 0.0
        %1337 = vmatprep.subr.mxu0 0.0
        %1338 = vmatpush1.msra.mxu0 0.0
        %1339 = vmatprep.subr.mxu0 0.0
        %1340 = vmatpush1.msra.mxu0 0.0
        %1341 = vmatprep.subr.mxu0 0.0
        %1342 = vmatpush1.msra.mxu0 0.0
        %1343 = vmatprep.subr.mxu0 0.0
        %1344 = vmatpush1.msra.mxu0 0.0
        %1345 = vmatprep.subr.mxu0 0.0
        %1346 = vmatpush1.msra.mxu0 0.0
        %1347 = vmatprep.subr.mxu0 0.0
        %1348 = vmatpush1.msra.mxu0 0.0
        %1349 = vmatprep.subr.mxu0 0.0
        %1350 = vmatpush1.msra.mxu0 0.0
        %1351 = vmatprep.subr.mxu0 0.0
        %1352 = vmatpush1.msra.mxu0 0.0
        %1353 = vmatprep.subr.mxu0 0.0
        %1354 = vmatpush1.msra.mxu0 0.0
        %1355 = vmatprep.subr.mxu0 0.0
        %1356 = vmatpush1.msra.mxu0 0.0
        %1357 = vmatprep.subr.mxu0 0.0
        %1358 = vmatpush1.msra.mxu0 0.0
        %1359 = vmatprep.subr.mxu0 0.0
        %1360 = vmatpush1.msra.mxu0 0.0
        %1361 = vmatprep.subr.mxu0 0.0
        %1362 = vmatpush1.msra.mxu0 0.0
        %1363 = vmatprep.subr.mxu0 0.0
        %1364 = vmatpush1.msra.mxu0 0.0
        %1365 = vmatprep.subr.mxu0 0.0
        %1366 = vmatpush1.msra.mxu0 0.0
        %1367 = vmatprep.subr.mxu0 0.0
        %1368 = vmatpush1.msra.mxu0 0.0
        %1369 = vmatprep.mubr.f32.mxu0 0.0
        %1370 = vmatmul.mubr.f32.gmra.mrb[0].mxu0 %v1303
        %v1371 = vpop.f32.mrb[0].mxu0
        %v1372 = vadd.f32 0.0, %v1371
        %v1373 = vpop.f32.mrb[0].mxu0
        %1374 = vdwg.mxu0
        %1375 = vrot.lane.b32.xlu0 %v687, 104
        %v1376 = vpop.permute.xlu0 %1375
        %1377 = vrot.lane.b32.xlu0 %v875, 104
        %v1378 = vpop.permute.xlu0 %1377
        %v1379 = vsel %vm878, %v1376, 0
        %v1381 = vsel %vm878, %v1378, 0
        %1383 = vmatprep.subr.mxu0 0.0
        %1384 = vmatpush1.xpose.msra.mxu0 %v1381
        %1385 = vmatprep.subr.mxu0 0.0
        %1386 = vmatpush1.xpose.msra.mxu0 0.0
        %1387 = vmatprep.subr.mxu0 0.0
        %1388 = vmatpush1.xpose.msra.mxu0 0.0
        %1389 = vmatprep.subr.mxu0 0.0
        %1390 = vmatpush1.xpose.msra.mxu0 0.0
        %1391 = vmatprep.subr.mxu0 0.0
        %1392 = vmatpush1.xpose.msra.mxu0 0.0
        %1393 = vmatprep.subr.mxu0 0.0
        %1394 = vmatpush1.xpose.msra.mxu0 0.0
        %1395 = vmatprep.subr.mxu0 0.0
        %1396 = vmatpush1.xpose.msra.mxu0 0.0
        %1397 = vmatprep.subr.mxu0 0.0
        %1398 = vmatpush1.xpose.msra.mxu0 0.0
        %1399 = vmatprep.subr.mxu0 0.0
        %1400 = vmatpush1.xpose.msra.mxu0 0.0
        %1401 = vmatprep.subr.mxu0 0.0
        %1402 = vmatpush1.xpose.msra.mxu0 0.0
        %1403 = vmatprep.subr.mxu0 0.0
        %1404 = vmatpush1.xpose.msra.mxu0 0.0
        %1405 = vmatprep.subr.mxu0 0.0
        %1406 = vmatpush1.xpose.msra.mxu0 0.0
        %1407 = vmatprep.subr.mxu0 0.0
        %1408 = vmatpush1.xpose.msra.mxu0 0.0
        %1409 = vmatprep.subr.mxu0 0.0
        %1410 = vmatpush1.xpose.msra.mxu0 0.0
        %1411 = vmatprep.subr.mxu0 0.0
        %1412 = vmatpush1.xpose.msra.mxu0 0.0
        %1413 = vmatprep.subr.mxu0 0.0
        %1414 = vmatpush1.xpose.msra.mxu0 0.0
        %1415 = vmatprep.subr.mxu0 0.0
        %1416 = vmatpush1.xpose.msra.mxu0 0.0
        %1417 = vmatprep.subr.mxu0 0.0
        %1418 = vmatpush1.xpose.msra.mxu0 0.0
        %1419 = vmatprep.subr.mxu0 0.0
        %1420 = vmatpush1.xpose.msra.mxu0 0.0
        %1421 = vmatprep.subr.mxu0 0.0
        %1422 = vmatpush1.xpose.msra.mxu0 0.0
        %1423 = vmatprep.subr.mxu0 0.0
        %1424 = vmatpush1.xpose.msra.mxu0 0.0
        %1425 = vmatprep.subr.mxu0 0.0
        %1426 = vmatpush1.xpose.msra.mxu0 0.0
        %1427 = vmatprep.subr.mxu0 0.0
        %1428 = vmatpush1.xpose.msra.mxu0 0.0
        %1429 = vmatprep.subr.mxu0 0.0
        %1430 = vmatpush1.xpose.msra.mxu0 0.0
        %1431 = vmatprep.subr.mxu0 0.0
        %1432 = vmatpush1.xpose.msra.mxu0 0.0
        %1433 = vmatprep.subr.mxu0 0.0
        %1434 = vmatpush1.xpose.msra.mxu0 0.0
        %1435 = vmatprep.subr.mxu0 0.0
        %1436 = vmatpush1.xpose.msra.mxu0 0.0
        %1437 = vmatprep.subr.mxu0 0.0
        %1438 = vmatpush1.xpose.msra.mxu0 0.0
        %1439 = vmatprep.subr.mxu0 0.0
        %1440 = vmatpush1.xpose.msra.mxu0 0.0
        %1441 = vmatprep.subr.mxu0 0.0
        %1442 = vmatpush1.xpose.msra.mxu0 0.0
        %1443 = vmatprep.subr.mxu0 0.0
        %1444 = vmatpush1.xpose.msra.mxu0 0.0
        %1445 = vmatprep.subr.mxu0 0.0
        %1446 = vmatpush1.xpose.msra.mxu0 0.0
        %1447 = vmatprep.mubr.f32.mxu0 0.0
        %1448 = vmatmul.mubr.f32.gmra.mrb[0].mxu0 %v1379
        %v1449 = vpop.f32.mrb[0].mxu0
        %v1450 = vadd.f32 0.0, %v1449
        %v1451 = vpop.f32.mrb[0].mxu0
        %1452 = vdwg.mxu0
        %v1453 = vsel %vm878, %v1450, -inf
        %1454 = vmax.xlane.f32.xlu0 %v1453
        %v1455 = vpop.xlane.xlu0 %1454
        %v1456 = vsub.f32 %v1450, %v1455
        %v1457 = vmul.f32 %v1456, 1.442695
        %v1458 = vpow.pop %v1457
        %v1459 = vsel %vm878, %v1458, 0.0
        %1460 = vadd.xlane.f32.xlu0 %v1459
        %v1461 = vpop.xlane.xlu0 %1460
        %v1462 = vrcp.pop %v1461
        %v1463 = vmul.f32 %v1458, %v1462
        %s1464 = scalar_lea.vmem %s594, 24 [#allocation18]
        %1465 = vst.msk [vmem:[%s1464] sm:$0xff] %vm878, %v1463
        %1466 = vrot.lane.b32.xlu0 %v877, 104
        %v1467 = vpop.permute.xlu0 %1466
        %v1470 = vsel %vm878, %v1463, 0
        %1472 = vmatprep.subr.mxu0 0.0
        %1473 = vmatpush1.msra.mxu0 %v1467
        %1474 = vmatprep.subr.mxu0 0.0
        %1475 = vmatpush1.msra.mxu0 0.0
        %1476 = vmatprep.subr.mxu0 0.0
        %1477 = vmatpush1.msra.mxu0 0.0
        %1478 = vmatprep.subr.mxu0 0.0
        %1479 = vmatpush1.msra.mxu0 0.0
        %1480 = vmatprep.subr.mxu0 0.0
        %1481 = vmatpush1.msra.mxu0 0.0
        %1482 = vmatprep.subr.mxu0 0.0
        %1483 = vmatpush1.msra.mxu0 0.0
        %1484 = vmatprep.subr.mxu0 0.0
        %1485 = vmatpush1.msra.mxu0 0.0
        %1486 = vmatprep.subr.mxu0 0.0
        %1487 = vmatpush1.msra.mxu0 0.0
        %1488 = vmatprep.subr.mxu0 0.0
        %1489 = vmatpush1.msra.mxu0 0.0
        %1490 = vmatprep.subr.mxu0 0.0
        %1491 = vmatpush1.msra.mxu0 0.0
        %1492 = vmatprep.subr.mxu0 0.0
        %1493 = vmatpush1.msra.mxu0 0.0
        %1494 = vmatprep.subr.mxu0 0.0
        %1495 = vmatpush1.msra.mxu0 0.0
        %1496 = vmatprep.subr.mxu0 0.0
        %1497 = vmatpush1.msra.mxu0 0.0
        %1498 = vmatprep.subr.mxu0 0.0
        %1499 = vmatpush1.msra.mxu0 0.0
        %1500 = vmatprep.subr.mxu0 0.0
        %1501 = vmatpush1.msra.mxu0 0.0
        %1502 = vmatprep.subr.mxu0 0.0
        %1503 = vmatpush1.msra.mxu0 0.0
        %1504 = vmatprep.subr.mxu0 0.0
        %1505 = vmatpush1.msra.mxu0 0.0
        %1506 = vmatprep.subr.mxu0 0.0
        %1507 = vmatpush1.msra.mxu0 0.0
        %1508 = vmatprep.subr.mxu0 0.0
        %1509 = vmatpush1.msra.mxu0 0.0
        %1510 = vmatprep.subr.mxu0 0.0
        %1511 = vmatpush1.msra.mxu0 0.0
        %1512 = vmatprep.subr.mxu0 0.0
        %1513 = vmatpush1.msra.mxu0 0.0
        %1514 = vmatprep.subr.mxu0 0.0
        %1515 = vmatpush1.msra.mxu0 0.0
        %1516 = vmatprep.subr.mxu0 0.0
        %1517 = vmatpush1.msra.mxu0 0.0
        %1518 = vmatprep.subr.mxu0 0.0
        %1519 = vmatpush1.msra.mxu0 0.0
        %1520 = vmatprep.subr.mxu0 0.0
        %1521 = vmatpush1.msra.mxu0 0.0
        %1522 = vmatprep.subr.mxu0 0.0
        %1523 = vmatpush1.msra.mxu0 0.0
        %1524 = vmatprep.subr.mxu0 0.0
        %1525 = vmatpush1.msra.mxu0 0.0
        %1526 = vmatprep.subr.mxu0 0.0
        %1527 = vmatpush1.msra.mxu0 0.0
        %1528 = vmatprep.subr.mxu0 0.0
        %1529 = vmatpush1.msra.mxu0 0.0
        %1530 = vmatprep.subr.mxu0 0.0
        %1531 = vmatpush1.msra.mxu0 0.0
        %1532 = vmatprep.subr.mxu0 0.0
        %1533 = vmatpush1.msra.mxu0 0.0
        %1534 = vmatprep.subr.mxu0 0.0
        %1535 = vmatpush1.msra.mxu0 0.0
        %1536 = vmatprep.mubr.f32.mxu0 0.0
        %1537 = vmatmul.mubr.f32.gmra.mrb[0].mxu0 %v1470
        %v1538 = vpop.f32.mrb[0].mxu0
        %v1539 = vadd.f32 0.0, %v1538
        %v1540 = vpop.f32.mrb[0].mxu0
        %1541 = vdwg.mxu0
        %1543 = vrot.lane.b32.xlu0 %v1205, 8
        %v1544 = vpop.permute.xlu0 %1543
        %1547 = vrot.lane.b32.xlu0 %v1372, 16
        %v1548 = vpop.permute.xlu0 %1547
        %1551 = vrot.lane.b32.xlu0 %v1539, 24
        %v1552 = vpop.permute.xlu0 %1551
        %v1554 = vsel %vm878, %v1037, %v1544
        %vm1555 = vcmask 130048
        %v1556 = vsel %vm1555, %v1554, %v1548
        %vm1557 = vcmask 195584
        %v1558 = vsel %vm1557, %v1556, %v1552
        %p1559 = scmp.eq.s32.totalorder %s45, 0
        // Predicated region
        $region97: #{tpu_custom_call.1} parent=63 // pred_check
          %p1560 = pneg %p1559
        $region98: #{tpu_custom_call.1} parent=63 // pred_check_branch
          %1562 = sbr.rel (%p1560) target = $region100
        $region99: #{tpu_custom_call.1} parent=63 // pred_region
          %1563 = vst.msk [vmem:[#allocation2] sm:$0xff] %vm616, 0.0
        $region100: #{tpu_custom_call.1} parent=63 // pred_fallthru
          _
        %v1564 = vld [vmem:[#allocation2] sm:$0xff]
        %v1566 = vsel %vm616, %v1558, 0
        %1568 = vmatprep.subr.mxu0 0.0
        %1569 = vmatpush1.msra.mxu0 %v605
        %1570 = vmatprep.subr.mxu0 0.0
        %1571 = vmatpush1.msra.mxu0 %v606
        %1572 = vmatprep.subr.mxu0 0.0
        %1573 = vmatpush1.msra.mxu0 %v607
        %1574 = vmatprep.subr.mxu0 0.0
        %1575 = vmatpush1.msra.mxu0 %v608
        %1576 = vmatprep.subr.mxu0 0.0
        %1577 = vmatpush1.msra.mxu0 0.0
        %1578 = vmatprep.subr.mxu0 0.0
        %1579 = vmatpush1.msra.mxu0 0.0
        %1580 = vmatprep.subr.mxu0 0.0
        %1581 = vmatpush1.msra.mxu0 0.0
        %1582 = vmatprep.subr.mxu0 0.0
        %1583 = vmatpush1.msra.mxu0 0.0
        %1584 = vmatprep.subr.mxu0 0.0
        %1585 = vmatpush1.msra.mxu0 0.0
        %1586 = vmatprep.subr.mxu0 0.0
        %1587 = vmatpush1.msra.mxu0 0.0
        %1588 = vmatprep.subr.mxu0 0.0
        %1589 = vmatpush1.msra.mxu0 0.0
        %1590 = vmatprep.subr.mxu0 0.0
        %1591 = vmatpush1.msra.mxu0 0.0
        %1592 = vmatprep.subr.mxu0 0.0
        %1593 = vmatpush1.msra.mxu0 0.0
        %1594 = vmatprep.subr.mxu0 0.0
        %1595 = vmatpush1.msra.mxu0 0.0
        %1596 = vmatprep.subr.mxu0 0.0
        %1597 = vmatpush1.msra.mxu0 0.0
        %1598 = vmatprep.subr.mxu0 0.0
        %1599 = vmatpush1.msra.mxu0 0.0
        %1600 = vmatprep.subr.mxu0 0.0
        %1601 = vmatpush1.msra.mxu0 0.0
        %1602 = vmatprep.subr.mxu0 0.0
        %1603 = vmatpush1.msra.mxu0 0.0
        %1604 = vmatprep.subr.mxu0 0.0
        %1605 = vmatpush1.msra.mxu0 0.0
        %1606 = vmatprep.subr.mxu0 0.0
        %1607 = vmatpush1.msra.mxu0 0.0
        %1608 = vmatprep.subr.mxu0 0.0
        %1609 = vmatpush1.msra.mxu0 0.0
        %1610 = vmatprep.subr.mxu0 0.0
        %1611 = vmatpush1.msra.mxu0 0.0
        %1612 = vmatprep.subr.mxu0 0.0
        %1613 = vmatpush1.msra.mxu0 0.0
        %1614 = vmatprep.subr.mxu0 0.0
        %1615 = vmatpush1.msra.mxu0 0.0
        %1616 = vmatprep.subr.mxu0 0.0
        %1617 = vmatpush1.msra.mxu0 0.0
        %1618 = vmatprep.subr.mxu0 0.0
        %1619 = vmatpush1.msra.mxu0 0.0
        %1620 = vmatprep.subr.mxu0 0.0
        %1621 = vmatpush1.msra.mxu0 0.0
        %1622 = vmatprep.subr.mxu0 0.0
        %1623 = vmatpush1.msra.mxu0 0.0
        %1624 = vmatprep.subr.mxu0 0.0
        %1625 = vmatpush1.msra.mxu0 0.0
        %1626 = vmatprep.subr.mxu0 0.0
        %1627 = vmatpush1.msra.mxu0 0.0
        %1628 = vmatprep.subr.mxu0 0.0
        %1629 = vmatpush1.msra.mxu0 0.0
        %1630 = vmatprep.subr.mxu0 0.0
        %1631 = vmatpush1.msra.mxu0 0.0
        %1632 = vmatprep.mubr.f32.mxu0 0.0
        %1633 = vmatmul.mubr.f32.gmra.mrb[0].mxu0 %v1566
        %v1634 = vpop.f32.mrb[0].mxu0
        %v1635 = vadd.f32 0.0, %v1634
        %v1636 = vpop.f32.mrb[0].mxu0
        %1637 = vdwg.mxu0
        %v1638 = vadd.f32 %v1564, %v1635
        %1639 = vst.msk [vmem:[#allocation2] sm:$0xff] %vm616, %v1638
        // Predicated region
        $region101: #{tpu_custom_call.1} parent=63 // pred_check
          %p1640 = pneg %p1559
        $region102: #{tpu_custom_call.1} parent=63 // pred_check_branch
          %1642 = sbr.rel (%p1640) target = $region104
        $region103: #{tpu_custom_call.1} parent=63 // pred_region
          %v1643 = vld [vmem:[#allocation2] sm:$0xff]
          %v1644 = vld [vmem:[%s10] sm:$0x1]
          %v1646 = vlaneseq
          %v1647 = vshrl.u32 %v1646, 7
          %v1648 = vsub.s32 0, %v1647
          %v1649 = vrot.slane %v1644, %v1648
          %v1651 = vadd.f32 %v1643, %v1649
          %1652 = vst.msk [vmem:[%s587] sm:$0xff] %vm616, %v1651
        $region104: #{tpu_custom_call.1} parent=63 // pred_fallthru
          _
        %s1653 = sand.u32 %s315, 1
        %s1654 = scalar_lea.sflag [#allocation7], %s1653
        %s1655 = sand.u32 %s315, 1
        %s1656 = smul.addr %s1655, 8
        %s1657 = scalar_lea.vmem [#allocation17], %s1656
        %s1658 = sand.u32 %s345, 1
        %s1659 = scalar_lea.sflag [#allocation19], %s1658
        %s1660 = sand.u32 %s345, 1
        %s1661 = smul.addr %s1660, 32
        %s1662 = scalar_lea.vmem [#allocation18], %s1661
        // Predicated region
        $region105: #{tpu_custom_call.1} parent=63 // pred_check
          %p1663 = pneg %p325
        $region106: #{tpu_custom_call.1} parent=63 // pred_check_branch
          %1665 = sbr.rel (%p1663) target = $region108
        $region107: #{tpu_custom_call.1} parent=63 // pred_region
          %s1667 = ssub.s32 128, 128
          %1668 = vsyncadd %s1654, %s1667
          %s1669 = sadd.s32 %s44, %s43
          %s1670 = smul.addr %s1669, 128
          %s1671 = scalar_lea.hbm %s11, %s1670
          %s1673 = sshll.u32 %s1657, 4
          %s1674 = int_to_ptr.vmem [resolvable:$true] %s1673
          %1676 = dma.vmem_to_hbm [thread:$0]  %s1674, 128, %s1671, %s1654
        $region108: #{tpu_custom_call.1} parent=63 // pred_fallthru
          _
        // Predicated region
        $region109: #{tpu_custom_call.1} parent=63 // pred_check
          %p1677 = pneg %p355
        $region110: #{tpu_custom_call.1} parent=63 // pred_check_branch
          %1679 = sbr.rel (%p1677) target = $region112
        $region111: #{tpu_custom_call.1} parent=63 // pred_region
          %s1680 = smul.u32 4, %s45
          %s1682 = ssub.s32 512, 512
          %1683 = vsyncadd %s1659, %s1682
          %s1684 = sadd.s32 %s44, %s1680
          %s1685 = smul.addr %s43, 4
          %s1686 = sadd.s32 %s1684, %s1685
          %s1687 = smul.addr %s1686, 128
          %s1688 = scalar_lea.hbm %s12, %s1687
          %s1689 = sshll.u32 %s1662, 4
          %s1690 = int_to_ptr.vmem [resolvable:$true] %s1689
          %1695 = dma.vmem_to_hbm [thread:$0]  %s1690, 512, %s1688, %s1659, 128, 128, 8
        $region112: #{tpu_custom_call.1} parent=63 // pred_fallthru
          _
      $region64: #{tpu_custom_call.1} parent=5 // pred_fallthru
        _
      %p1696 = scmp.le.s32.totalorder 2, %s33
      // Predicated region
      $region113: #{tpu_custom_call.1} parent=5 // pred_check
        %p1697 = pneg %p1696
      $region114: #{tpu_custom_call.1} parent=5 // pred_check_branch
        %1699 = sbr.rel (%p1697) target = $region116
      $region115: #{tpu_custom_call.1} parent=5 // pred_region
        %s1700 = ssub.s32 %s33, 2
        // Predicated region
        $region117: #{tpu_custom_call.1} parent=115 // pred_check
          %p1701 = pneg %p331
        $region118: #{tpu_custom_call.1} parent=115 // pred_check_branch
          %1703 = sbr.rel (%p1701) target = $region120
        $region119: #{tpu_custom_call.1} parent=115 // pred_region
          %s1704 = sand.u32 %s316, 1
          %s1705 = scalar_lea.sflag [#allocation7], %s1704
          %s1706 = sand.u32 %s316, 1
          %s1707 = smul.addr %s1706, 8
          %s1708 = scalar_lea.vmem [#allocation17], %s1707
          %1709 = dma.done %s1705, 128
        $region120: #{tpu_custom_call.1} parent=115 // pred_fallthru
          _
        // Predicated region
        $region121: #{tpu_custom_call.1} parent=115 // pred_check
          %p1710 = pneg %p361
        $region122: #{tpu_custom_call.1} parent=115 // pred_check_branch
          %1712 = sbr.rel (%p1710) target = $region124
        $region123: #{tpu_custom_call.1} parent=115 // pred_region
          %s1713 = sand.u32 %s346, 1
          %s1714 = scalar_lea.sflag [#allocation19], %s1713
          %s1715 = sand.u32 %s346, 1
          %s1716 = smul.addr %s1715, 32
          %s1717 = scalar_lea.vmem [#allocation18], %s1716
          %1718 = dma.done %s1714, 512
        $region124: #{tpu_custom_call.1} parent=115 // pred_fallthru
          _
      $region116: #{tpu_custom_call.1} parent=5 // pred_fallthru
        _
    $region6: #{tpu_custom_call.1} parent=1 // loop_footer
      %s37 = sadd.s32 1, %s33
    $region7: #{tpu_custom_call.1} parent=1 // loop_footer_branch
      %32 = sbr.rel target = $region3
    $region8: #{tpu_custom_call.1} parent=1 // loop_exit
      _
    %1719 = vsyncpa [#allocation6], 1
    %s1720 = scalar_lea.sflag [#allocation6], 1
    %1721 = vsyncpa %s1720, 1
    %1722 = vsyncpa [#allocation9], 1
    %s1723 = scalar_lea.sflag [#allocation9], 1
    %1724 = vsyncpa %s1723, 1
    %1725 = vsyncpa [#allocation12], 1
    %1726 = vsyncpa [#allocation15], 1
    %1727 = vsyncpa [#allocation7], 1
    %s1728 = scalar_lea.sflag [#allocation7], 1
    %1729 = vsyncpa %s1728, 1
    %1730 = vsyncpa [#allocation19], 1
    %s1731 = scalar_lea.sflag [#allocation19], 1
    %1732 = vsyncpa %s1731, 1

</llo_original>
